<compile_context>
chip_gen: v5e
topology: v5e:2x2
jax: 0.10.0
libtpu: 0.0.40
codegen_flags: <defaults>
</compile_context>

<pallas_src>
import math
import functools

import jax
import jax.numpy as jnp
from jax.experimental import pallas as pl
from jax.experimental.pallas import tpu as pltpu


def _round_up(a, m):
    return (a + m - 1) // m * m


# ----------------------------------------------------------------------------
# Pallas kernel: streaming class-token attention over token tiles.
# Grid = (batch blocks [parallel], token tiles [arbitrary]).
# ----------------------------------------------------------------------------
def mha_cls_kernel(
    x_ref,        # (BB, Nt, D) bf16  token block (pos-encoded; seq row 0 = class token)
    wscore_ref,   # (D, nh)     bf16  folded  Wk_h^T @ (q_h / sqrt(hd))
    wout_ref,     # (nh, D, C)  f32   folded  Wv_h^T @ Wo_h^T @ Wc^T
    ball_ref,     # (1, C)      f32   folded  sum_h bv_h@Wo_h^T@Wc^T + bo@Wc^T + bc
    logits_ref,   # (BB, C)     f32
    m_ref,        # (BB, nh)    f32   scratch: running max
    l_ref,        # (BB, nh)    f32   scratch: running softmax denominator
    z_ref,        # (BB, nh, D) f32   scratch: running prob-weighted token sum (unnormalized)
    *, num_heads, seq_len, tile_n,
):
    ni = pl.program_id(1)
    BB, Nt, D = x_ref.shape

    @pl.when(ni == 0)
    def _():
        m_ref[...] = jnp.full(m_ref.shape, -jnp.inf, dtype=m_ref.dtype)
        l_ref[...] = jnp.zeros(l_ref.shape, dtype=l_ref.dtype)
        z_ref[...] = jnp.zeros(z_ref.shape, dtype=z_ref.dtype)

    x = x_ref[...]                                          # (BB, Nt, D) bf16

    # All head scores for this tile in ONE matmul (K projection folded away).
    # Nt is a multiple of 16, so the reshape is a layout-free view.
    s = jnp.dot(x.reshape(BB * Nt, D), wscore_ref[...],
                preferred_element_type=jnp.float32)
    s = s.reshape(BB, Nt, num_heads)
    s = jnp.swapaxes(s, 1, 2)                               # (BB, nh, Nt) f32

    # Mask padded tokens (N was padded to a multiple of tile_n in the wrapper).
    valid = jax.lax.broadcasted_iota(jnp.int32, (BB, num_heads, Nt), 2) < (
        seq_len - ni * tile_n)
    s = jnp.where(valid, s, -jnp.inf)

    # Streaming-softmax statistics (f32, lane-axis reductions).
    m_prev = m_ref[...]                                     # (BB, nh)
    m_new = jnp.maximum(m_prev, jnp.max(s, axis=-1))        # (BB, nh)
    alpha = jnp.exp(m_prev - m_new)                         # (BB, nh); 0 on first tile
    e = jnp.exp(s - m_new[:, :, None])                      # (BB, nh, Nt); 0 on padding
    l_ref[...] = alpha * l_ref[...] + jnp.sum(e, axis=-1)

    # Probability-weighted token sum: full-D MXU work ('bhn,bnd->bhd' PV form).
    pw = jnp.einsum("bhn,bnd->bhd", e.astype(x.dtype), x,
                    preferred_element_type=jnp.float32)     # (BB, nh, D)
    z_ref[...] = alpha[:, :, None] * z_ref[...] + pw
    m_ref[...] = m_new

    # Finalize once per batch block: normalize and apply the fused
    # V-proj / out-proj / classifier weight (tiny (D, C) matmuls).
    @pl.when(ni == pl.num_programs(1) - 1)
    def _():
        z_norm = z_ref[...] / l_ref[...][:, :, None]        # (BB, nh, D) f32
        acc = jnp.zeros(logits_ref.shape, jnp.float32)
        for h in range(num_heads):                          # nh is small & static
            acc = acc + jnp.dot(z_norm[:, h, :], wout_ref[h],
                                preferred_element_type=jnp.float32)
        logits_ref[...] = acc + ball_ref[...]


# ----------------------------------------------------------------------------
# Positional encoding (matches the PyTorch module) — plain JAX, computed once.
# ----------------------------------------------------------------------------
def get_positional_encoding(height, width, d_model):
    y_pos = jnp.arange(height, dtype=jnp.float32)[:, None]
    x_pos = jnp.arange(width, dtype=jnp.float32)[:, None]
    div_term = jnp.exp(
        jnp.arange(0, d_model, 2, dtype=jnp.float32) * -(math.log(10000.0) / d_model)
    )
    y_sin = jnp.sin(y_pos * div_term)
    y_cos = jnp.cos(y_pos * div_term)
    x_sin = jnp.sin(x_pos * div_term)
    x_cos = jnp.cos(x_pos * div_term)

    pe_even = y_sin[:, None, :] + x_sin[None, :, :]
    pe_odd = y_cos[:, None, :] + x_cos[None, :, :]

    pe = jnp.zeros((height, width, d_model), dtype=jnp.float32)
    pe = pe.at[:, :, 0::2].set(pe_even)
    pe = pe.at[:, :, 1::2].set(pe_odd)
    return pe


# ----------------------------------------------------------------------------
# Token-tile sizing: keep the double-buffered bf16 x block + per-tile f32
# temporaries comfortably inside the default scoped VMEM on every generation
# (v5e 16 MiB, v6e 32 MiB, v7x 64 MiB physical).
# ----------------------------------------------------------------------------
def _choose_tile_n(N, D, block_b, num_heads, vmem_budget_bytes=6 * 2**20):
    per_row = block_b * (2 * D * 2 + (D + 3 * num_heads) * 4)
    tile = vmem_budget_bytes // max(per_row, 1)
    tile = max(16, min(int(tile), 1024))
    tile = (tile // 16) * 16
    tile = min(tile, _round_up(N, 16))
    return max(tile, 16)


# ----------------------------------------------------------------------------
# Wrapper: token assembly + one-time weight folding + pallas_call.
# ----------------------------------------------------------------------------
def mha_classifier_forward(x, params, *, num_heads, height_max, width_max,
                           tile_n=None):
    B, D, H, W = x.shape
    assert D % num_heads == 0, "d_model must be divisible by num_heads"
    nh = num_heads
    hd = D // nh
    C = params["wc"].shape[0]
    # The module views pos_encoding(height_max, width_max) as (H*W, D).
    assert H * W == height_max * width_max, "H*W must equal height_max*width_max"

    f32, bf16 = jnp.float32, jnp.bfloat16

    # ---- token assembly (f32) ----------------------------------------------
    x_seq = jnp.transpose(x, (0, 2, 3, 1)).reshape(B, H * W, D)
    pos = get_positional_encoding(height_max, width_max, D).reshape(H * W, D)
    x_seq = x_seq + pos[None, :, :]
    cls_tok = jnp.broadcast_to(params["class_token"], (B, 1, D))
    x_seq = jnp.concatenate([cls_tok, x_seq], axis=1)          # (B, N, D) f32
    N = H * W + 1

    # ---- one-time weight folding (f32, cast afterwards) --------------------
    scale = 1.0 / math.sqrt(hd)
    # Class-token query is batch-independent (no pos-enc on the class token).
    q_cls = params["class_token"][0] @ params["wq"].T + params["bq"]        # (1, D)
    q_heads = (q_cls[0] * scale).reshape(nh, hd)                            # (nh, hd)
    wk_heads = params["wk"].reshape(nh, hd, D)
    w_score = jnp.einsum("hj,hjd->dh", q_heads, wk_heads).astype(bf16)      # (D, nh)

    wcT = params["wc"].T.astype(f32)                                        # (D, C)
    woT_heads = params["wo"].T.reshape(nh, hd, D)                           # (nh, hd, D)
    woc = jnp.einsum("hjd,dc->hjc", woT_heads, wcT)                         # (nh, hd, C)
    wv_heads = params["wv"].reshape(nh, hd, D)
    w_out = jnp.einsum("hjd,hjc->hdc", wv_heads, woc).astype(f32)           # (nh, D, C)
    bv_heads = params["bv"].reshape(nh, hd)
    b_all = (jnp.einsum("hj,hjc->c", bv_heads, woc)
             + params["bo"][0] @ wcT + params["bc"][0]).reshape(1, C).astype(f32)

    # ---- padding & tiling ---------------------------------------------------
    block_b = 8                                  # always a legal sublane multiple
    b_pad = _round_up(B, block_b)
    if tile_n is None:
        tile_n = _choose_tile_n(N, D, block_b, nh)
    tile_n = max(16, _round_up(tile_n, 16))
    n_pad = _round_up(N, tile_n)

    x_pad = jnp.pad(x_seq, ((0, b_pad - B), (0, n_pad - N), (0, 0))).astype(bf16)

    grid = (b_pad // block_b, n_pad // tile_n)

    kernel = functools.partial(mha_cls_kernel, num_heads=nh,
                               seq_len=N, tile_n=tile_n)

    def const_spec(shape):
        nd = len(shape)
        return pl.BlockSpec(shape, lambda bi, ni, _nd=nd: (0,) * _nd)

    in_specs = [
        pl.BlockSpec((block_b, tile_n, D), lambda bi, ni: (bi, ni, 0)),
        const_spec(w_score.shape),
        const_spec(w_out.shape),
        const_spec(b_all.shape),
    ]
    out_specs = pl.BlockSpec((block_b, C), lambda bi, ni: (bi, 0))

    logits = pl.pallas_call(
        kernel,
        grid=grid,
        in_specs=in_specs,
        out_specs=out_specs,
        out_shape=jax.ShapeDtypeStruct((b_pad, C), jnp.float32),
        scratch_shapes=[
            pltpu.VMEM((block_b, nh), jnp.float32),      # running max
            pltpu.VMEM((block_b, nh), jnp.float32),      # running denominator
            pltpu.VMEM((block_b, nh, D), jnp.float32),   # running weighted token sum
        ],
        compiler_params=pltpu.CompilerParams(
            dimension_semantics=("parallel", "arbitrary"),
        ),
    )(x_pad, w_score, w_out, b_all)

    return logits[:B]


# ----------------------------------------------------------------------------
# Pure-JAX reference (mirrors the PyTorch forward exactly, full N x N
# attention, f32) for verification of the algebraic restructuring.
# ----------------------------------------------------------------------------
def reference_forward(x, params, *, num_heads, height_max, width_max):
    B, D, H, W = x.shape
    head_dim = D // num_heads
    x_seq = jnp.transpose(x, (0, 2, 3, 1)).reshape(B, H * W, D)
    pos = get_positional_encoding(height_max, width_max, D).reshape(H * W, D)
    x_seq = x_seq + pos[None]
    cls = jnp.broadcast_to(params["class_token"], (B, 1, D))
    x_seq = jnp.concatenate([cls, x_seq], axis=1)
    N = x_seq.shape[1]

    def lin(a, w, b):
        return a @ w.T + b

    q = lin(x_seq, params["wq"], params["bq"][0]).reshape(B, N, num_heads, head_dim).transpose(0, 2, 1, 3)
    k = lin(x_seq, params["wk"], params["bk"][0]).reshape(B, N, num_heads, head_dim).transpose(0, 2, 1, 3)
    v = lin(x_seq, params["wv"], params["bv"][0]).reshape(B, N, num_heads, head_dim).transpose(0, 2, 1, 3)

    s = jnp.einsum("bhqd,bhkd->bhqk", q, k) / math.sqrt(head_dim)
    p = jax.nn.softmax(s, axis=-1)
    attn = jnp.einsum("bhqk,bhkd->bhqd", p, v)
    attn = attn.transpose(0, 2, 1, 3).reshape(B, N, D)
    out = lin(attn, params["wo"], params["bo"][0])
    cls_out = out[:, 0]
    return lin(cls_out, params["wc"], params["bc"][0])


# ----------------------------------------------------------------------------
def make_params(key, d_model, num_heads, num_classes):
    ks = jax.random.split(key, 11)
    scale = 0.1

    def w(k, shape):
        return scale * jax.random.normal(k, shape, dtype=jnp.float32)

    return {
        "wq": w(ks[0], (d_model, d_model)), "bq": w(ks[1], (1, d_model)),
        "wk": w(ks[2], (d_model, d_model)), "bk": w(ks[3], (1, d_model)),
        "wv": w(ks[4], (d_model, d_model)), "bv": w(ks[5], (1, d_model)),
        "wo": w(ks[6], (d_model, d_model)), "bo": w(ks[7], (1, d_model)),
        "wc": w(ks[8], (num_classes, d_model)), "bc": w(ks[9], (1, num_classes)),
        "class_token": jax.random.normal(ks[10], (1, 1, d_model), dtype=jnp.float32),
    }


if __name__ == "__main__":
    # Small, forward-consistent shapes.
    B, d_model, H, W = 2, 32, 8, 8
    num_heads, num_classes = 4, 2
    height_max, width_max = H, W     # forward requires H*W == height_max*width_max

    key = jax.random.PRNGKey(0)
    kx, kp = jax.random.split(key)
    x = jax.random.normal(kx, (B, d_model, H, W), dtype=jnp.float32)
    params = make_params(kp, d_model, num_heads, num_classes)

    # Small forced token tile (N=65 -> padded to 80 -> 5 tiles) exercises the
    # multi-tile streaming-softmax path.
    logits = mha_classifier_forward(
        x, params, num_heads=num_heads, height_max=height_max,
        width_max=width_max, tile_n=16)
    logits = jax.block_until_ready(logits)

    # Auto tile sizing (single tile at this tiny N) exercises the other path.
    logits_auto = mha_classifier_forward(
        x, params, num_heads=num_heads, height_max=height_max,
        width_max=width_max)
    logits_auto = jax.block_until_ready(logits_auto)

    ref = reference_forward(
        x, params, num_heads=num_heads, height_max=height_max, width_max=width_max)

    assert logits.shape == (B, num_classes)
    # bf16 MXU inputs + bf16 token cast -> relaxed tolerance vs the f32 reference.
    assert jnp.allclose(logits, ref, atol=3e-2, rtol=3e-2), (
        f"mismatch (tiled): pallas={logits}, ref={ref}")
    assert jnp.allclose(logits_auto, ref, atol=3e-2, rtol=3e-2), (
        f"mismatch (auto): pallas={logits_auto}, ref={ref}")
    print("KERNEL_OK")
</pallas_src>

<mosaic_0001>
module attributes {stable_mosaic.version = 11 : i64} {
  func.func @mha_cls_kernel(%arg0: i32, %arg1: i32, %arg2: memref<8x16x32xbf16, #tpu.memory_space<vmem>>, %arg3: memref<32x4xbf16, #tpu.memory_space<vmem>>, %arg4: memref<4x32x2xf32, #tpu.memory_space<vmem>>, %arg5: memref<1x2xf32, #tpu.memory_space<vmem>>, %arg6: memref<8x2xf32, #tpu.memory_space<vmem>>, %arg7: memref<8x4xf32, #tpu.memory_space<vmem>>, %arg8: memref<8x4xf32, #tpu.memory_space<vmem>>, %arg9: memref<8x4x32xf32, #tpu.memory_space<vmem>>) attributes {dimension_semantics = [#tpu.dimension_semantics<parallel>, #tpu.dimension_semantics<arbitrary>], iteration_bounds = array<i64: 1, 5>, scalar_prefetch = 0 : i64, scratch_operands = 3 : i64, tpu.core_type = #tpu.core_type<tc>, window_params = [{transform_indices = @transform_0, window_bounds = array<i64: 8, 16, 32>}, {pipeline_mode = #tpu.pipeline_mode<synchronous>, transform_indices = @transform_1, window_bounds = array<i64: 32, 4>}, {pipeline_mode = #tpu.pipeline_mode<synchronous>, transform_indices = @transform_2, window_bounds = array<i64: 4, 32, 2>}, {pipeline_mode = #tpu.pipeline_mode<synchronous>, transform_indices = @transform_3, window_bounds = array<i64: 1, 2>}, {transform_indices = @transform_4, window_bounds = array<i64: 8, 2>}]} {
    %c0_i32 = arith.constant 0 : i32
    %0 = arith.cmpi eq, %arg1, %c0_i32 : i32
    %1 = arith.extui %0 : i1 to i32
    %c0_i32_0 = arith.constant 0 : i32
    %2 = arith.cmpi ne, %1, %c0_i32_0 : i32
    scf.if %2 {
      %cst_24 = arith.constant 0xFF800000 : f32
      %42 = vector.broadcast %cst_24 : f32 to vector<8x4xf32>
      %c0_25 = arith.constant 0 : index
      %c0_26 = arith.constant 0 : index
      %43 = vector.load %arg7[%c0_25, %c0_26] : memref<8x4xf32, #tpu.memory_space<vmem>>, vector<8x4xf32>
      tpu.vector_store %arg7[%c0_25, %c0_26], %42 {strides = array<i32>} : memref<8x4xf32, #tpu.memory_space<vmem>>, vector<8x4xf32>,
      %cst_27 = arith.constant 0.000000e+00 : f32
      %44 = vector.broadcast %cst_27 : f32 to vector<8x4xf32>
      %c0_28 = arith.constant 0 : index
      %c0_29 = arith.constant 0 : index
      %45 = vector.load %arg8[%c0_28, %c0_29] : memref<8x4xf32, #tpu.memory_space<vmem>>, vector<8x4xf32>
      tpu.vector_store %arg8[%c0_28, %c0_29], %44 {strides = array<i32>} : memref<8x4xf32, #tpu.memory_space<vmem>>, vector<8x4xf32>,
      %cst_30 = arith.constant 0.000000e+00 : f32
      %46 = vector.broadcast %cst_30 : f32 to vector<8x4x32xf32>
      %c0_31 = arith.constant 0 : index
      %c0_32 = arith.constant 0 : index
      %c0_33 = arith.constant 0 : index
      %47 = vector.load %arg9[%c0_31, %c0_32, %c0_33] : memref<8x4x32xf32, #tpu.memory_space<vmem>>, vector<8x4x32xf32>
      tpu.vector_store %arg9[%c0_31, %c0_32, %c0_33], %46 {strides = array<i32>} : memref<8x4x32xf32, #tpu.memory_space<vmem>>, vector<8x4x32xf32>,
    } else {
    }
    %c0 = arith.constant 0 : index
    %c0_1 = arith.constant 0 : index
    %c0_2 = arith.constant 0 : index
    %3 = vector.load %arg2[%c0, %c0_1, %c0_2] : memref<8x16x32xbf16, #tpu.memory_space<vmem>>, vector<8x16x32xbf16>
    %4 = vector.shape_cast %3 : vector<8x16x32xbf16> to vector<128x32xbf16>
    %c0_3 = arith.constant 0 : index
    %c0_4 = arith.constant 0 : index
    %5 = vector.load %arg3[%c0_3, %c0_4] : memref<32x4xbf16, #tpu.memory_space<vmem>>, vector<32x4xbf16>
    %cst = arith.constant dense<0.000000e+00> : vector<128x4xf32>
    %6 = tpu.matmul %4, %5, %cst {dimension_numbers = #tpu.dot_dimension_numbers<[1], [0], [0], [1], [0, 0, 1, 1], [], []>} : vector<128x32xbf16>, vector<32x4xbf16>, vector<128x4xf32> -> vector<128x4xf32>
    %7 = vector.shape_cast %6 : vector<128x4xf32> to vector<8x16x4xf32>
    %8 = tpu.transpose %7, [0, 2, 1] : vector<8x16x4xf32> -> vector<8x4x16xf32>
    %9 = tpu.iota {dimensions = array<i32: 2>} : vector<8x4x16xi32>
    %c16_i32 = arith.constant 16 : i32
    %10 = arith.muli %arg1, %c16_i32 : i32
    %c65_i32 = arith.constant 65 : i32
    %11 = arith.subi %c65_i32, %10 : i32
    %12 = vector.broadcast %11 : i32 to vector<8x4x16xi32>
    %13 = arith.cmpi slt, %9, %12 : vector<8x4x16xi32>
    %cst_5 = arith.constant 0xFF800000 : f32
    %14 = vector.broadcast %cst_5 : f32 to vector<8x4x16xf32>
    %15 = arith.select %13, %8, %14 : vector<8x4x16xi1>, vector<8x4x16xf32>
    %c0_6 = arith.constant 0 : index
    %c0_7 = arith.constant 0 : index
    %16 = vector.load %arg7[%c0_6, %c0_7] : memref<8x4xf32, #tpu.memory_space<vmem>>, vector<8x4xf32>
    %cst_8 = arith.constant dense<0xFF800000> : vector<8x4xf32>
    %17 = vector.multi_reduction <maximumf>, %15, %cst_8 [2] : vector<8x4x16xf32> to vector<8x4xf32>
    %18 = arith.maximumf %16, %17 : vector<8x4xf32>
    %19 = arith.subf %16, %18 : vector<8x4xf32>
    %20 = math.exp %19 : vector<8x4xf32>
    %21 = vector.shape_cast %18 : vector<8x4xf32> to vector<8x4x1xf32>
    %22 = vector.broadcast %21 : vector<8x4x1xf32> to vector<8x4x16xf32>
    %23 = arith.subf %15, %22 : vector<8x4x16xf32>
    %24 = math.exp %23 : vector<8x4x16xf32>
    %c0_9 = arith.constant 0 : index
    %c0_10 = arith.constant 0 : index
    %25 = vector.load %arg8[%c0_9, %c0_10] : memref<8x4xf32, #tpu.memory_space<vmem>>, vector<8x4xf32>
    %26 = arith.mulf %20, %25 : vector<8x4xf32>
    %cst_11 = arith.constant dense<0.000000e+00> : vector<8x4xf32>
    %27 = vector.multi_reduction <add>, %24, %cst_11 [2] : vector<8x4x16xf32> to vector<8x4xf32>
    %28 = arith.addf %26, %27 : vector<8x4xf32>
    %c0_12 = arith.constant 0 : index
    %c0_13 = arith.constant 0 : index
    %29 = vector.load %arg8[%c0_12, %c0_13] : memref<8x4xf32, #tpu.memory_space<vmem>>, vector<8x4xf32>
    tpu.vector_store %arg8[%c0_12, %c0_13], %28 {strides = array<i32>} : memref<8x4xf32, #tpu.memory_space<vmem>>, vector<8x4xf32>,
    %30 = arith.truncf %24 : vector<8x4x16xf32> to vector<8x4x16xbf16>
    "tpu.trace_start"() <{level = 10 : i32, message = "bhn,bnd->bhd"}> : () -> ()
    %cst_14 = arith.constant dense<0.000000e+00> : vector<8x4x32xf32>
    %31 = tpu.matmul %30, %3, %cst_14 {dimension_numbers = #tpu.dot_dimension_numbers<[2], [1], [1], [2], [0, 0, 0, 1, 1, 2], [0], [0]>} : vector<8x4x16xbf16>, vector<8x16x32xbf16>, vector<8x4x32xf32> -> vector<8x4x32xf32>
    "tpu.trace_stop"() : () -> ()
    %32 = vector.shape_cast %20 : vector<8x4xf32> to vector<8x4x1xf32>
    %c0_15 = arith.constant 0 : index
    %c0_16 = arith.constant 0 : index
    %c0_17 = arith.constant 0 : index
    %33 = vector.load %arg9[%c0_15, %c0_16, %c0_17] : memref<8x4x32xf32, #tpu.memory_space<vmem>>, vector<8x4x32xf32>
    %34 = vector.broadcast %32 : vector<8x4x1xf32> to vector<8x4x32xf32>
    %35 = arith.mulf %34, %33 : vector<8x4x32xf32>
    %36 = arith.addf %35, %31 : vector<8x4x32xf32>
    %c0_18 = arith.constant 0 : index
    %c0_19 = arith.constant 0 : index
    %c0_20 = arith.constant 0 : index
    %37 = vector.load %arg9[%c0_18, %c0_19, %c0_20] : memref<8x4x32xf32, #tpu.memory_space<vmem>>, vector<8x4x32xf32>
    tpu.vector_store %arg9[%c0_18, %c0_19, %c0_20], %36 {strides = array<i32>} : memref<8x4x32xf32, #tpu.memory_space<vmem>>, vector<8x4x32xf32>,
    %c0_21 = arith.constant 0 : index
    %c0_22 = arith.constant 0 : index
    %38 = vector.load %arg7[%c0_21, %c0_22] : memref<8x4xf32, #tpu.memory_space<vmem>>, vector<8x4xf32>
    tpu.vector_store %arg7[%c0_21, %c0_22], %18 {strides = array<i32>} : memref<8x4xf32, #tpu.memory_space<vmem>>, vector<8x4xf32>,
    %c4_i32 = arith.constant 4 : i32
    %39 = arith.cmpi eq, %arg1, %c4_i32 : i32
    %40 = arith.extui %39 : i1 to i32
    %c0_i32_23 = arith.constant 0 : i32
    %41 = arith.cmpi ne, %40, %c0_i32_23 : i32
    scf.if %41 {
      %c0_24 = arith.constant 0 : index
      %c0_25 = arith.constant 0 : index
      %c0_26 = arith.constant 0 : index
      %42 = vector.load %arg9[%c0_24, %c0_25, %c0_26] : memref<8x4x32xf32, #tpu.memory_space<vmem>>, vector<8x4x32xf32>
      %c0_27 = arith.constant 0 : index
      %c0_28 = arith.constant 0 : index
      %43 = vector.load %arg8[%c0_27, %c0_28] : memref<8x4xf32, #tpu.memory_space<vmem>>, vector<8x4xf32>
      %44 = vector.shape_cast %43 : vector<8x4xf32> to vector<8x4x1xf32>
      %45 = vector.broadcast %44 : vector<8x4x1xf32> to vector<8x4x32xf32>
      %46 = arith.divf %42, %45 : vector<8x4x32xf32>
      %cst_29 = arith.constant 0.000000e+00 : f32
      %47 = vector.broadcast %cst_29 : f32 to vector<8x2xf32>
      %48 = vector.extract_strided_slice %46 {offsets = [0, 0, 0], sizes = [8, 1, 32], strides = [1, 1, 1]} : vector<8x4x32xf32> to vector<8x1x32xf32>
      %49 = vector.shape_cast %48 : vector<8x1x32xf32> to vector<8x32xf32>
      %c0_30 = arith.constant 0 : index
      %c0_31 = arith.constant 0 : index
      %c0_32 = arith.constant 0 : index
      %50 = vector.load %arg4[%c0_30, %c0_31, %c0_32] : memref<4x32x2xf32, #tpu.memory_space<vmem>>, vector<1x32x2xf32>
      %51 = vector.shape_cast %50 : vector<1x32x2xf32> to vector<32x2xf32>
      %cst_33 = arith.constant dense<0.000000e+00> : vector<8x2xf32>
      %52 = tpu.matmul %49, %51, %cst_33 {dimension_numbers = #tpu.dot_dimension_numbers<[1], [0], [0], [1], [0, 0, 1, 1], [], []>} : vector<8x32xf32>, vector<32x2xf32>, vector<8x2xf32> -> vector<8x2xf32>
      %53 = arith.addf %47, %52 : vector<8x2xf32>
      %54 = vector.extract_strided_slice %46 {offsets = [0, 1, 0], sizes = [8, 1, 32], strides = [1, 1, 1]} : vector<8x4x32xf32> to vector<8x1x32xf32>
      %55 = vector.shape_cast %54 : vector<8x1x32xf32> to vector<8x32xf32>
      %c1 = arith.constant 1 : index
      %c0_34 = arith.constant 0 : index
      %c0_35 = arith.constant 0 : index
      %56 = vector.load %arg4[%c1, %c0_34, %c0_35] : memref<4x32x2xf32, #tpu.memory_space<vmem>>, vector<1x32x2xf32>
      %57 = vector.shape_cast %56 : vector<1x32x2xf32> to vector<32x2xf32>
      %cst_36 = arith.constant dense<0.000000e+00> : vector<8x2xf32>
      %58 = tpu.matmul %55, %57, %cst_36 {dimension_numbers = #tpu.dot_dimension_numbers<[1], [0], [0], [1], [0, 0, 1, 1], [], []>} : vector<8x32xf32>, vector<32x2xf32>, vector<8x2xf32> -> vector<8x2xf32>
      %59 = arith.addf %53, %58 : vector<8x2xf32>
      %60 = vector.extract_strided_slice %46 {offsets = [0, 2, 0], sizes = [8, 1, 32], strides = [1, 1, 1]} : vector<8x4x32xf32> to vector<8x1x32xf32>
      %61 = vector.shape_cast %60 : vector<8x1x32xf32> to vector<8x32xf32>
      %c2 = arith.constant 2 : index
      %c0_37 = arith.constant 0 : index
      %c0_38 = arith.constant 0 : index
      %62 = vector.load %arg4[%c2, %c0_37, %c0_38] : memref<4x32x2xf32, #tpu.memory_space<vmem>>, vector<1x32x2xf32>
      %63 = vector.shape_cast %62 : vector<1x32x2xf32> to vector<32x2xf32>
      %cst_39 = arith.constant dense<0.000000e+00> : vector<8x2xf32>
      %64 = tpu.matmul %61, %63, %cst_39 {dimension_numbers = #tpu.dot_dimension_numbers<[1], [0], [0], [1], [0, 0, 1, 1], [], []>} : vector<8x32xf32>, vector<32x2xf32>, vector<8x2xf32> -> vector<8x2xf32>
      %65 = arith.addf %59, %64 : vector<8x2xf32>
      %66 = vector.extract_strided_slice %46 {offsets = [0, 3, 0], sizes = [8, 1, 32], strides = [1, 1, 1]} : vector<8x4x32xf32> to vector<8x1x32xf32>
      %67 = vector.shape_cast %66 : vector<8x1x32xf32> to vector<8x32xf32>
      %c3 = arith.constant 3 : index
      %c0_40 = arith.constant 0 : index
      %c0_41 = arith.constant 0 : index
      %68 = vector.load %arg4[%c3, %c0_40, %c0_41] : memref<4x32x2xf32, #tpu.memory_space<vmem>>, vector<1x32x2xf32>
      %69 = vector.shape_cast %68 : vector<1x32x2xf32> to vector<32x2xf32>
      %cst_42 = arith.constant dense<0.000000e+00> : vector<8x2xf32>
      %70 = tpu.matmul %67, %69, %cst_42 {dimension_numbers = #tpu.dot_dimension_numbers<[1], [0], [0], [1], [0, 0, 1, 1], [], []>} : vector<8x32xf32>, vector<32x2xf32>, vector<8x2xf32> -> vector<8x2xf32>
      %71 = arith.addf %65, %70 : vector<8x2xf32>
      %c0_43 = arith.constant 0 : index
      %c0_44 = arith.constant 0 : index
      %72 = vector.load %arg5[%c0_43, %c0_44] : memref<1x2xf32, #tpu.memory_space<vmem>>, vector<1x2xf32>
      %73 = vector.broadcast %72 : vector<1x2xf32> to vector<8x2xf32>
      %74 = arith.addf %71, %73 : vector<8x2xf32>
      %c0_45 = arith.constant 0 : index
      %c0_46 = arith.constant 0 : index
      %75 = vector.load %arg6[%c0_45, %c0_46] : memref<8x2xf32, #tpu.memory_space<vmem>>, vector<8x2xf32>
      tpu.vector_store %arg6[%c0_45, %c0_46], %74 {strides = array<i32>} : memref<8x2xf32, #tpu.memory_space<vmem>>, vector<8x2xf32>,
    } else {
    }
    return
  }
  func.func @transform_0(%arg0: i32, %arg1: i32) -> (i32, i32, i32) {
    %c0_i32 = arith.constant 0 : i32
    %c0_i32_0 = arith.constant 0 : i32
    return %arg0, %arg1, %c0_i32 : i32, i32, i32
  }
  func.func @transform_1(%arg0: i32, %arg1: i32) -> (i32, i32) {
    %c0_i32 = arith.constant 0 : i32
    %c0_i32_0 = arith.constant 0 : i32
    %c0_i32_1 = arith.constant 0 : i32
    return %c0_i32, %c0_i32_0 : i32, i32
  }
  func.func @transform_2(%arg0: i32, %arg1: i32) -> (i32, i32, i32) {
    %c0_i32 = arith.constant 0 : i32
    %c0_i32_0 = arith.constant 0 : i32
    %c0_i32_1 = arith.constant 0 : i32
    %c0_i32_2 = arith.constant 0 : i32
    return %c0_i32, %c0_i32_0, %c0_i32_1 : i32, i32, i32
  }
  func.func @transform_3(%arg0: i32, %arg1: i32) -> (i32, i32) {
    %c0_i32 = arith.constant 0 : i32
    %c0_i32_0 = arith.constant 0 : i32
    %c0_i32_1 = arith.constant 0 : i32
    return %c0_i32, %c0_i32_0 : i32, i32
  }
  func.func @transform_4(%arg0: i32, %arg1: i32) -> (i32, i32) {
    %c0_i32 = arith.constant 0 : i32
    %c0_i32_0 = arith.constant 0 : i32
    return %arg0, %c0_i32 : i32, i32
  }
}

</mosaic_0001>

<llo_original>
// kernel: tpu_custom_call.1
$region0: #{tpu_custom_call.1}
  #allocation0 [shape = 'u32[]', space=smem, size = 0x4, offset = 0x4, fixed_abs, tag = 'smem constant byte address 0x4 - core index']
  #allocation1 [shape = 'u32[72,128]{1,0:T(1,128)}', space=vmem, size = 0x9000, scoped, tag = 'internal scratch']
  #allocation2 [shape = 'f32[8,4]{1,0:T(8,128)}', space=vmem, size = 0x1000, scoped, tag = 'scratch operand']
  #allocation3 [shape = 'f32[8,4]{1,0:T(8,128)}', space=vmem, size = 0x1000, scoped, tag = 'scratch operand']
  #allocation4 [shape = 'f32[8,4,32]{2,1,0:T(4,128)}', space=vmem, size = 0x4000, scoped, tag = 'scratch operand']
  %s0 = inlined_call_operand.vmem [shape: bf16[8,80,32], index: 0, kind: input, shape index: {}]
  %s1 = inlined_call_operand.vmem [shape: bf16[32,4], index: 1, kind: input, shape index: {}]
  %s2 = inlined_call_operand.vmem [shape: f32[4,32,2], index: 2, kind: input, shape index: {}]
  %s3 = inlined_call_operand.vmem [shape: f32[1,2], index: 3, kind: input, shape index: {}]
  %s4 = inlined_call_operand.vmem [shape: f32[8,2], index: 4, kind: output, shape index: {}]
  %s5 = sld [smem:[#allocation0]]
  $region98: #{tpu_custom_call.1} parent=0
    _
  %s7 = ssub.s32 1, %s5
  %s8 = scalar_select 0, %s7, %s5
  $region1: #{tpu_custom_call.1} parent=0
    #allocation5 [shape = 'u8[65536]{0}', space=vmem, size = 0x10000, scoped, tag = 'input window, operand 0']
    loop: start=0, step=1, limit=7
    $region2: #{tpu_custom_call.1} parent=1 // loop_pre_header
      _
    $region3: #{tpu_custom_call.1} parent=1 // loop_header
      %s10 = sphi 0, %s14
      %p11 = scmp.ge.s32.totalorder %s10, 7
      %s17 = sphi 0, %s29
      %s18 = sphi 0, %s25
      %s19 = sphi 0, %s17
      %s20 = sphi 0, %s18
      %s21 = sphi 0, %s19
      %s22 = sphi 0, %s20
      %s34 = sphi 0, %s36
      %s37 = sphi 0, %s34
      %s38 = sphi 0, %s37
      %s54 = sphi 0, %s38
      %s58 = sphi 0, %s58
      %s60 = sphi 0, %s58
      %s61 = sphi 0, %s60
      %s75 = sphi 0, %s61
      %s79 = sphi 0, %s79
      %s81 = sphi 0, %s79
      %s82 = sphi 0, %s81
      %s96 = sphi 0, %s82
      %s100 = sphi 0, %s100
      %s102 = sphi 0, %s100
      %s103 = sphi 0, %s102
      %s117 = sphi 0, %s103
      %s123 = sphi 0, %s125
      %s126 = sphi 0, %s123
      %s127 = sphi 0, %s126
      %s143 = sphi 0, %s127
    $region4: #{tpu_custom_call.1} parent=1 // loop_header_branch
      %13 = sbr.rel (%p11) target = $region8
    $region5: #{tpu_custom_call.1} parent=1 // loop_body
      %s15 = ssub.s32 %s10, 1
      %s16 = ssub.s32 %s10, 2
      %s23 = sadd.s32 1, %s18
      %p24 = scmp.ge.s32.totalorder %s23, 5
      %s25 = scalar_select %p24, 0, %s23
      %s26 = sadd.s32 1, %s17
      %s27 = scalar_select %p24, %s26, %s17
      %p28 = scmp.ge.s32.totalorder %s27, 1
      %s29 = scalar_select %p28, 0, %s27
      %s30 = ssub.s32 %s17, %s29
      %s31 = ssub.s32 %s18, %s25
      %s32 = sor.u32 %s30, %s31
      %p33 = scmp.eq.s32.totalorder %s32, 0
      %s35 = sadd.s32 %s34, 1
      %s36 = scalar_select %p33, %s34, %s35
      %p39 = pneg %p33
      %p40 = scmp.eq.s32.totalorder %s10, 4
      %p41 = por %p39, %p40
      %p42 = scmp.ne.s32.totalorder %s34, %s37
      %p43 = scmp.eq.s32.totalorder %s10, 0
      %p44 = por %p42, %p43
      %p45 = scmp.ne.s32.totalorder %s34, %s37
      %p46 = scmp.eq.s32.totalorder %s15, 4
      %p47 = por %p45, %p46
      %p48 = scmp.ne.s32.totalorder %s37, %s38
      %p49 = scmp.eq.s32.totalorder %s15, 0
      %p50 = por %p48, %p49
      %p51 = scmp.ne.s32.totalorder %s37, %s38
      %p52 = scmp.eq.s32.totalorder %s16, 4
      %p53 = por %p51, %p52
      %p55 = scmp.ne.s32.totalorder %s38, %s54
      %p56 = scmp.eq.s32.totalorder %s16, 0
      %p57 = por %p55, %p56
      %s59 = sadd.s32 %s58, 1
      %p62 = scmp.eq.s32.totalorder %s10, 4
      %p63 = scmp.ne.s32.totalorder %s58, %s60
      %p64 = scmp.eq.s32.totalorder %s10, 0
      %p65 = por %p63, %p64
      %p66 = scmp.ne.s32.totalorder %s58, %s60
      %p67 = scmp.eq.s32.totalorder %s15, 4
      %p68 = por %p66, %p67
      %p69 = scmp.ne.s32.totalorder %s60, %s61
      %p70 = scmp.eq.s32.totalorder %s15, 0
      %p71 = por %p69, %p70
      %p72 = scmp.ne.s32.totalorder %s60, %s61
      %p73 = scmp.eq.s32.totalorder %s16, 4
      %p74 = por %p72, %p73
      %p76 = scmp.ne.s32.totalorder %s61, %s75
      %p77 = scmp.eq.s32.totalorder %s16, 0
      %p78 = por %p76, %p77
      %s80 = sadd.s32 %s79, 1
      %p83 = scmp.eq.s32.totalorder %s10, 4
      %p84 = scmp.ne.s32.totalorder %s79, %s81
      %p85 = scmp.eq.s32.totalorder %s10, 0
      %p86 = por %p84, %p85
      %p87 = scmp.ne.s32.totalorder %s79, %s81
      %p88 = scmp.eq.s32.totalorder %s15, 4
      %p89 = por %p87, %p88
      %p90 = scmp.ne.s32.totalorder %s81, %s82
      %p91 = scmp.eq.s32.totalorder %s15, 0
      %p92 = por %p90, %p91
      %p93 = scmp.ne.s32.totalorder %s81, %s82
      %p94 = scmp.eq.s32.totalorder %s16, 4
      %p95 = por %p93, %p94
      %p97 = scmp.ne.s32.totalorder %s82, %s96
      %p98 = scmp.eq.s32.totalorder %s16, 0
      %p99 = por %p97, %p98
      %s101 = sadd.s32 %s100, 1
      %p104 = scmp.eq.s32.totalorder %s10, 4
      %p105 = scmp.ne.s32.totalorder %s100, %s102
      %p106 = scmp.eq.s32.totalorder %s10, 0
      %p107 = por %p105, %p106
      %p108 = scmp.ne.s32.totalorder %s100, %s102
      %p109 = scmp.eq.s32.totalorder %s15, 4
      %p110 = por %p108, %p109
      %p111 = scmp.ne.s32.totalorder %s102, %s103
      %p112 = scmp.eq.s32.totalorder %s15, 0
      %p113 = por %p111, %p112
      %p114 = scmp.ne.s32.totalorder %s102, %s103
      %p115 = scmp.eq.s32.totalorder %s16, 4
      %p116 = por %p114, %p115
      %p118 = scmp.ne.s32.totalorder %s103, %s117
      %p119 = scmp.eq.s32.totalorder %s16, 0
      %p120 = por %p118, %p119
      %s121 = ssub.s32 %s17, %s29
      %p122 = scmp.eq.s32.totalorder %s121, 0
      %s124 = sadd.s32 %s123, 1
      %s125 = scalar_select %p122, %s123, %s124
      %p128 = pneg %p122
      %p129 = scmp.eq.s32.totalorder %s10, 4
      %p130 = por %p128, %p129
      %p131 = scmp.ne.s32.totalorder %s123, %s126
      %p132 = scmp.eq.s32.totalorder %s10, 0
      %p133 = por %p131, %p132
      %p134 = scmp.ne.s32.totalorder %s123, %s126
      %p135 = scmp.eq.s32.totalorder %s15, 4
      %p136 = por %p134, %p135
      %p137 = scmp.ne.s32.totalorder %s126, %s127
      %p138 = scmp.eq.s32.totalorder %s15, 0
      %p139 = por %p137, %p138
      %p140 = scmp.ne.s32.totalorder %s126, %s127
      %p141 = scmp.eq.s32.totalorder %s16, 4
      %p142 = por %p140, %p141
      %p144 = scmp.ne.s32.totalorder %s127, %s143
      %p145 = scmp.eq.s32.totalorder %s16, 0
      %p146 = por %p144, %p145
      %p147 = scmp.le.s32.totalorder 1, %s10
      %p148 = scmp.lt.s32.totalorder %s10, 6
      %p149 = pnand %p147, %p148
      %p150 = pneg %p149
      // Predicated region
      $region9: #{tpu_custom_call.1} parent=5 // pred_check
        _
      $region10: #{tpu_custom_call.1} parent=5 // pred_check_branch
        %152 = sbr.rel (%p149) target = $region12
      $region11: #{tpu_custom_call.1} parent=5 // pred_region
        %s153 = ssub.s32 %s10, 1
        // Predicated region
        $region13: #{tpu_custom_call.1} parent=11 // pred_check
          %p154 = pneg %p71
        $region14: #{tpu_custom_call.1} parent=11 // pred_check_branch
          %156 = sbr.rel (%p154) target = $region16
        $region15: #{tpu_custom_call.1} parent=11 // pred_region
          _
        $region16: #{tpu_custom_call.1} parent=11 // pred_fallthru
          _
        // Predicated region
        $region17: #{tpu_custom_call.1} parent=11 // pred_check
          %p157 = pneg %p92
        $region18: #{tpu_custom_call.1} parent=11 // pred_check_branch
          %159 = sbr.rel (%p157) target = $region20
        $region19: #{tpu_custom_call.1} parent=11 // pred_region
          _
        $region20: #{tpu_custom_call.1} parent=11 // pred_fallthru
          _
        // Predicated region
        $region21: #{tpu_custom_call.1} parent=11 // pred_check
          %p160 = pneg %p113
        $region22: #{tpu_custom_call.1} parent=11 // pred_check_branch
          %162 = sbr.rel (%p160) target = $region24
        $region23: #{tpu_custom_call.1} parent=11 // pred_region
          _
        $region24: #{tpu_custom_call.1} parent=11 // pred_fallthru
          _
      $region12: #{tpu_custom_call.1} parent=5 // pred_fallthru
        _
      %p163 = scmp.lt.s32.totalorder %s10, 5
      // Predicated region
      $region25: #{tpu_custom_call.1} parent=5 // pred_check
        %p164 = pneg %p163
      $region26: #{tpu_custom_call.1} parent=5 // pred_check_branch
        %166 = sbr.rel (%p164) target = $region28
      $region27: #{tpu_custom_call.1} parent=5 // pred_region
        // Predicated region
        $region29: #{tpu_custom_call.1} parent=27 // pred_check
          %p167 = pneg %p44
        $region30: #{tpu_custom_call.1} parent=27 // pred_check_branch
          %169 = sbr.rel (%p167) target = $region32
        $region31: #{tpu_custom_call.1} parent=27 // pred_region
          %s170 = sand.u32 %s34, 1
          %s171 = sand.u32 %s34, 1
          %s172 = smul.addr %s171, 64
          %s173 = scalar_lea.vmem [#allocation5], %s172
          %s174 = smul.u32 8, %s17
          %s175 = smul.u32 2, %s18
          %s176 = smul.addr %s174, 10
          %s177 = sadd.s32 %s175, %s176
          %s178 = smul.addr %s177, 4
          %s179 = scalar_lea.vmem %s0, %s178
          // Predicated region
          $region33: #{tpu_custom_call.1} parent=31 // pred_check
            _
          $region34: #{tpu_custom_call.1} parent=31 // pred_check_branch
            %181 = sbr.rel (0) target = $region36
          $region35: #{tpu_custom_call.1} parent=31 // pred_region
            // Predicated region
            $region37: #{tpu_custom_call.1} parent=35 // pred_check
              _
            $region38: #{tpu_custom_call.1} parent=35 // pred_check_branch
              %183 = sbr.rel target = $region40
            $region39: #{tpu_custom_call.1} parent=35 // pred_region
              // Predicated region
              $region52: #{tpu_custom_call.1} parent=39 // pred_check
                _
              $region53: #{tpu_custom_call.1} parent=39 // pred_check_branch
                %229 = sbr.rel (0) target = $region55
              $region54: #{tpu_custom_call.1} parent=39 // pred_region
                loop: start=0, step=1, limit=1
                $region56: #{tpu_custom_call.1} parent=54 // loop_pre_header
                  _
                $region57: #{tpu_custom_call.1} parent=54 // loop_header
                  %s231 = sphi 0, %s235
                  %p232 = scmp.ge.s32.totalorder %s231, 1
                  %s236 = sphi %s179, %s179
                  %s237 = sphi %s173, %s173
                $region58: #{tpu_custom_call.1} parent=54 // loop_header_branch
                  %234 = sbr.rel (%p232) target = $region62
                $region59: #{tpu_custom_call.1} parent=54 // loop_body
                  _
                $region60: #{tpu_custom_call.1} parent=54 // loop_footer
                  %s235 = sadd.s32 1, %s231
                $region61: #{tpu_custom_call.1} parent=54 // loop_footer_branch
                  %230 = sbr.rel target = $region57
                $region62: #{tpu_custom_call.1} parent=54 // loop_exit
                  _
                %s239 = ssub.s32 16, 1
                loop: start=0, step=1, limit=1
                $region63: #{tpu_custom_call.1} parent=54 // loop_pre_header
                  _
                $region64: #{tpu_custom_call.1} parent=54 // loop_header
                  %s241 = sphi 0, %s245
                  %p242 = scmp.ge.s32.totalorder %s241, 1
                  %s246 = sphi %s179, %s179
                  %s247 = sphi %s173, %s173
                $region65: #{tpu_custom_call.1} parent=54 // loop_header_branch
                  %244 = sbr.rel (%p242) target = $region69
                $region66: #{tpu_custom_call.1} parent=54 // loop_body
                  %v248 = vld [vmem:[%s246] sm:%s239]
                  %249 = vst [vmem:[%s247] sm:%s239] %v248
                  %v250 = vld [vmem:[%s246 + $0x4] sm:%s239]
                  %251 = vst [vmem:[%s247 + $0x4] sm:%s239] %v250
                  %v252 = vld [vmem:[%s246 + $0x28] sm:%s239]
                  %253 = vst [vmem:[%s247 + $0x8] sm:%s239] %v252
                  %v254 = vld [vmem:[%s246 + $0x2c] sm:%s239]
                  %255 = vst [vmem:[%s247 + $0xc] sm:%s239] %v254
                  %v256 = vld [vmem:[%s246 + $0x50] sm:%s239]
                  %257 = vst [vmem:[%s247 + $0x10] sm:%s239] %v256
                  %v258 = vld [vmem:[%s246 + $0x54] sm:%s239]
                  %259 = vst [vmem:[%s247 + $0x14] sm:%s239] %v258
                  %v260 = vld [vmem:[%s246 + $0x78] sm:%s239]
                  %261 = vst [vmem:[%s247 + $0x18] sm:%s239] %v260
                  %v262 = vld [vmem:[%s246 + $0x7c] sm:%s239]
                  %263 = vst [vmem:[%s247 + $0x1c] sm:%s239] %v262
                  %v264 = vld [vmem:[%s246 + $0xa0] sm:%s239]
                  %265 = vst [vmem:[%s247 + $0x20] sm:%s239] %v264
                  %v266 = vld [vmem:[%s246 + $0xa4] sm:%s239]
                  %267 = vst [vmem:[%s247 + $0x24] sm:%s239] %v266
                  %v268 = vld [vmem:[%s246 + $0xc8] sm:%s239]
                  %269 = vst [vmem:[%s247 + $0x28] sm:%s239] %v268
                  %v270 = vld [vmem:[%s246 + $0xcc] sm:%s239]
                  %271 = vst [vmem:[%s247 + $0x2c] sm:%s239] %v270
                  %v272 = vld [vmem:[%s246 + $0xf0] sm:%s239]
                  %273 = vst [vmem:[%s247 + $0x30] sm:%s239] %v272
                  %v274 = vld [vmem:[%s246 + $0xf4] sm:%s239]
                  %275 = vst [vmem:[%s247 + $0x34] sm:%s239] %v274
                  %v276 = vld [vmem:[%s246 + $0x118] sm:%s239]
                  %277 = vst [vmem:[%s247 + $0x38] sm:%s239] %v276
                  %v278 = vld [vmem:[%s246 + $0x11c] sm:%s239]
                  %279 = vst [vmem:[%s247 + $0x3c] sm:%s239] %v278
                $region67: #{tpu_custom_call.1} parent=54 // loop_footer
                  %s245 = sadd.s32 1, %s241
                $region68: #{tpu_custom_call.1} parent=54 // loop_footer_branch
                  %240 = sbr.rel target = $region64
                $region69: #{tpu_custom_call.1} parent=54 // loop_exit
                  _
              $region55: #{tpu_custom_call.1} parent=39 // pred_fallthru
                _
            $region40: #{tpu_custom_call.1} parent=35 // pred_fallthru
              _
            // Predicated region
            $region41: #{tpu_custom_call.1} parent=35 // pred_check
              _
            $region42: #{tpu_custom_call.1} parent=35 // pred_check_branch
              %185 = sbr.rel (0) target = $region44
            $region43: #{tpu_custom_call.1} parent=35 // pred_region
              %s187 = ssub.s32 16, 1
              loop: start=0, step=1, limit=1
              $region45: #{tpu_custom_call.1} parent=43 // loop_pre_header
                _
              $region46: #{tpu_custom_call.1} parent=43 // loop_header
                %s189 = sphi 0, %s193
                %p190 = scmp.ge.s32.totalorder %s189, 1
                %s194 = sphi %s179, %s179
                %s195 = sphi %s173, %s173
              $region47: #{tpu_custom_call.1} parent=43 // loop_header_branch
                %192 = sbr.rel (%p190) target = $region51
              $region48: #{tpu_custom_call.1} parent=43 // loop_body
                %v196 = vld [vmem:[%s194] sm:%s187]
                %197 = vst [vmem:[%s195] sm:%s187] %v196
                %v198 = vld [vmem:[%s194 + $0x4] sm:%s187]
                %199 = vst [vmem:[%s195 + $0x4] sm:%s187] %v198
                %v200 = vld [vmem:[%s194 + $0x28] sm:%s187]
                %201 = vst [vmem:[%s195 + $0x8] sm:%s187] %v200
                %v202 = vld [vmem:[%s194 + $0x2c] sm:%s187]
                %203 = vst [vmem:[%s195 + $0xc] sm:%s187] %v202
                %v204 = vld [vmem:[%s194 + $0x50] sm:%s187]
                %205 = vst [vmem:[%s195 + $0x10] sm:%s187] %v204
                %v206 = vld [vmem:[%s194 + $0x54] sm:%s187]
                %207 = vst [vmem:[%s195 + $0x14] sm:%s187] %v206
                %v208 = vld [vmem:[%s194 + $0x78] sm:%s187]
                %209 = vst [vmem:[%s195 + $0x18] sm:%s187] %v208
                %v210 = vld [vmem:[%s194 + $0x7c] sm:%s187]
                %211 = vst [vmem:[%s195 + $0x1c] sm:%s187] %v210
                %v212 = vld [vmem:[%s194 + $0xa0] sm:%s187]
                %213 = vst [vmem:[%s195 + $0x20] sm:%s187] %v212
                %v214 = vld [vmem:[%s194 + $0xa4] sm:%s187]
                %215 = vst [vmem:[%s195 + $0x24] sm:%s187] %v214
                %v216 = vld [vmem:[%s194 + $0xc8] sm:%s187]
                %217 = vst [vmem:[%s195 + $0x28] sm:%s187] %v216
                %v218 = vld [vmem:[%s194 + $0xcc] sm:%s187]
                %219 = vst [vmem:[%s195 + $0x2c] sm:%s187] %v218
                %v220 = vld [vmem:[%s194 + $0xf0] sm:%s187]
                %221 = vst [vmem:[%s195 + $0x30] sm:%s187] %v220
                %v222 = vld [vmem:[%s194 + $0xf4] sm:%s187]
                %223 = vst [vmem:[%s195 + $0x34] sm:%s187] %v222
                %v224 = vld [vmem:[%s194 + $0x118] sm:%s187]
                %225 = vst [vmem:[%s195 + $0x38] sm:%s187] %v224
                %v226 = vld [vmem:[%s194 + $0x11c] sm:%s187]
                %227 = vst [vmem:[%s195 + $0x3c] sm:%s187] %v226
              $region49: #{tpu_custom_call.1} parent=43 // loop_footer
                %s193 = sadd.s32 1, %s189
              $region50: #{tpu_custom_call.1} parent=43 // loop_footer_branch
                %188 = sbr.rel target = $region46
              $region51: #{tpu_custom_call.1} parent=43 // loop_exit
                _
            $region44: #{tpu_custom_call.1} parent=35 // pred_fallthru
              _
          $region36: #{tpu_custom_call.1} parent=31 // pred_fallthru
            _
          %280 = vnop
        $region32: #{tpu_custom_call.1} parent=27 // pred_fallthru
          _
      $region28: #{tpu_custom_call.1} parent=5 // pred_fallthru
        _
      %p281 = scmp.le.s32.totalorder 1, %s10
      %p282 = scmp.lt.s32.totalorder %s10, 6
      %p283 = pnand %p281, %p282
      %p284 = pneg %p283
      // Predicated region
      $region70: #{tpu_custom_call.1} parent=5 // pred_check
        _
      $region71: #{tpu_custom_call.1} parent=5 // pred_check_branch
        %286 = sbr.rel (%p283) target = $region73
      $region72: #{tpu_custom_call.1} parent=5 // pred_region
        %s287 = ssub.s32 %s10, 1
        %s288 = sand.u32 %s37, 1
        %s289 = sand.u32 %s37, 1
        %s290 = smul.addr %s289, 64
        %s291 = scalar_lea.vmem [#allocation5], %s290
        // Predicated region
        $region74: #{tpu_custom_call.1} parent=72 // pred_check
          %p292 = pneg %p50
        $region75: #{tpu_custom_call.1} parent=72 // pred_check_branch
          %294 = sbr.rel (%p292) target = $region77
        $region76: #{tpu_custom_call.1} parent=72 // pred_region
          _
        $region77: #{tpu_custom_call.1} parent=72 // pred_fallthru
          _
        %s295 = sand.u32 %s37, 1
        %s296 = sand.u32 %s37, 1
        %s297 = smul.addr %s296, 64
        %s298 = scalar_lea.vmem [#allocation5], %s297
        %p299 = pneg %p50
        %p300 = pneg %p47
        %p301 = pneg %p71
        %p302 = pneg %p68
        %p303 = pneg %p92
        %p304 = pneg %p89
        %p305 = pneg %p113
        %p306 = pneg %p110
        %p307 = pneg %p139
        %p308 = pneg %p136
        %p309 = scmp.lt.s32.totalorder %s19, 0
        %s310 = scalar_select %p309, %s19, 0
        %s311 = smul.addr %s310, 8
        %s312 = scalar_lea.vmem %s4, %s311
        %s313 = smul.u32 8, %s19
        %s314 = smul.u32 2, %s20
        %p315 = scmp.lt.s32.totalorder %s19, 0
        %s316 = scalar_select %p315, %s19, 0
        %s317 = smul.addr %s316, 8
        %s318 = scalar_lea.vmem %s4, %s317
        %p320 = scmp.eq.s32.totalorder %s20, 0
        // Predicated region
        $region78: #{tpu_custom_call.1} parent=72 // pred_check
          %p321 = pneg %p320
        $region79: #{tpu_custom_call.1} parent=72 // pred_check_branch
          %323 = sbr.rel (%p321) target = $region81
        $region80: #{tpu_custom_call.1} parent=72 // pred_region
          %vm324 = vcmask 31744
          %325 = vst.msk [vmem:[#allocation2] sm:$0xff] %vm324, -inf
          %326 = vst.msk [vmem:[#allocation3] sm:$0xff] %vm324, 0.0
          %vm327 = vcmask 257024
          %328 = vst.msk [vmem:[#allocation4] sm:$0xf] %vm327, 0.0
          %329 = vst.msk [vmem:[#allocation4 + $0x4] sm:$0xf] %vm327, 0.0
          %330 = vst.msk [vmem:[#allocation4 + $0x8] sm:$0xf] %vm327, 0.0
          %331 = vst.msk [vmem:[#allocation4 + $0xc] sm:$0xf] %vm327, 0.0
          %332 = vst.msk [vmem:[#allocation4 + $0x10] sm:$0xf] %vm327, 0.0
          %333 = vst.msk [vmem:[#allocation4 + $0x14] sm:$0xf] %vm327, 0.0
          %334 = vst.msk [vmem:[#allocation4 + $0x18] sm:$0xf] %vm327, 0.0
          %335 = vst.msk [vmem:[#allocation4 + $0x1c] sm:$0xf] %vm327, 0.0
        $region81: #{tpu_custom_call.1} parent=72 // pred_fallthru
          _
        %v336 = vld [vmem:[%s291] sm:$0xf]
        %v337 = vld [vmem:[%s291 + $0x4] sm:$0xf]
        %v338 = vld [vmem:[%s291 + $0x8] sm:$0xf]
        %v339 = vld [vmem:[%s291 + $0xc] sm:$0xf]
        %v340 = vld [vmem:[%s291 + $0x10] sm:$0xf]
        %v341 = vld [vmem:[%s291 + $0x14] sm:$0xf]
        %v342 = vld [vmem:[%s291 + $0x18] sm:$0xf]
        %v343 = vld [vmem:[%s291 + $0x1c] sm:$0xf]
        %v344 = vld [vmem:[%s291 + $0x20] sm:$0xf]
        %v345 = vld [vmem:[%s291 + $0x24] sm:$0xf]
        %v346 = vld [vmem:[%s291 + $0x28] sm:$0xf]
        %v347 = vld [vmem:[%s291 + $0x2c] sm:$0xf]
        %v348 = vld [vmem:[%s291 + $0x30] sm:$0xf]
        %v349 = vld [vmem:[%s291 + $0x34] sm:$0xf]
        %v350 = vld [vmem:[%s291 + $0x38] sm:$0xf]
        %v351 = vld [vmem:[%s291 + $0x3c] sm:$0xf]
        %v352 = vld [vmem:[%s1] sm:$0xf]
        %v353 = vld [vmem:[%s1 + $0x4] sm:$0xf]
        %v354 = vld [vmem:[%s1 + $0x8] sm:$0xf]
        %v355 = vld [vmem:[%s1 + $0xc] sm:$0xf]
        %v372 = vunpack.c.l.b16 %v336
        %v373 = vunpack.c.l.b16 %v337
        %v374 = vunpack.c.l.b16 %v338
        %v375 = vunpack.c.l.b16 %v339
        %v376 = vunpack.c.l.b16 %v340
        %v377 = vunpack.c.l.b16 %v341
        %v378 = vunpack.c.l.b16 %v342
        %v379 = vunpack.c.l.b16 %v343
        %v380 = vunpack.c.l.b16 %v344
        %v381 = vunpack.c.l.b16 %v345
        %v382 = vunpack.c.l.b16 %v346
        %v383 = vunpack.c.l.b16 %v347
        %v384 = vunpack.c.l.b16 %v348
        %v385 = vunpack.c.l.b16 %v349
        %v386 = vunpack.c.l.b16 %v350
        %v387 = vunpack.c.l.b16 %v351
        %v388 = vpack.c.b16 %v373, %v372
        %v389 = vpack.c.b16 %v375, %v374
        %v390 = vpack.c.b16 %v377, %v376
        %v391 = vpack.c.b16 %v379, %v378
        %v392 = vpack.c.b16 %v381, %v380
        %v393 = vpack.c.b16 %v383, %v382
        %v394 = vpack.c.b16 %v385, %v384
        %v395 = vpack.c.b16 %v387, %v386
        %v400 = vunpack.c.l.b16 %v352
        %v401 = vunpack.c.l.b16 %v353
        %v402 = vunpack.c.l.b16 %v354
        %v403 = vunpack.c.l.b16 %v355
        %v404 = vpack.c.b16 %v401, %v400
        %v405 = vpack.c.b16 %v403, %v402
        %vm408 = vcmask 261120
        %v410 = vsel %vm408, %v388, 0
        %v413 = vsel %vm408, %v389, 0
        %v416 = vsel %vm408, %v390, 0
        %v419 = vsel %vm408, %v391, 0
        %v422 = vsel %vm408, %v392, 0
        %v425 = vsel %vm408, %v393, 0
        %v428 = vsel %vm408, %v394, 0
        %v431 = vsel %vm408, %v395, 0
        %433 = vmatpush.bf16.msra.mxu0 0
        %434 = vmatpush.bf16.msra.mxu0 0
        %435 = vmatpush.bf16.msra.mxu0 0
        %436 = vmatpush.bf16.msra.mxu0 0
        %437 = vmatpush.bf16.msra.mxu0 0
        %438 = vmatpush.bf16.msra.mxu0 0
        %439 = vmatpush.bf16.msra.mxu0 %v405
        %440 = vmatpush.bf16.msra.mxu0 %v404
        %441 = vmatmul.bf16.gmra.mxu0 %v410
        %v442 = vpop.f32.mrf.mxu0
        %v443 = vadd.f32 0.0, %v442
        %v444 = vpop.f32.mrf.mxu0
        %v445 = vadd.f32 0.0, %v444
        %446 = vmatmul.bf16.gmra.mxu0 %v413
        %v447 = vpop.f32.mrf.mxu0
        %v448 = vadd.f32 0.0, %v447
        %v449 = vpop.f32.mrf.mxu0
        %v450 = vadd.f32 0.0, %v449
        %451 = vmatmul.bf16.gmra.mxu0 %v416
        %v452 = vpop.f32.mrf.mxu0
        %v453 = vadd.f32 0.0, %v452
        %v454 = vpop.f32.mrf.mxu0
        %v455 = vadd.f32 0.0, %v454
        %456 = vmatmul.bf16.gmra.mxu0 %v419
        %v457 = vpop.f32.mrf.mxu0
        %v458 = vadd.f32 0.0, %v457
        %v459 = vpop.f32.mrf.mxu0
        %v460 = vadd.f32 0.0, %v459
        %461 = vmatmul.bf16.gmra.mxu0 %v422
        %v462 = vpop.f32.mrf.mxu0
        %v463 = vadd.f32 0.0, %v462
        %v464 = vpop.f32.mrf.mxu0
        %v465 = vadd.f32 0.0, %v464
        %466 = vmatmul.bf16.gmra.mxu0 %v425
        %v467 = vpop.f32.mrf.mxu0
        %v468 = vadd.f32 0.0, %v467
        %v469 = vpop.f32.mrf.mxu0
        %v470 = vadd.f32 0.0, %v469
        %471 = vmatmul.bf16.gmra.mxu0 %v428
        %v472 = vpop.f32.mrf.mxu0
        %v473 = vadd.f32 0.0, %v472
        %v474 = vpop.f32.mrf.mxu0
        %v475 = vadd.f32 0.0, %v474
        %476 = vmatmul.bf16.gmra.mxu0 %v431
        %v477 = vpop.f32.mrf.mxu0
        %v478 = vadd.f32 0.0, %v477
        %v479 = vpop.f32.mrf.mxu0
        %v480 = vadd.f32 0.0, %v479
        %481 = vdwg.mxu0
        %482 = vxpose.xlu0.b32.start [1/16] %v443, 128
        %483 = vxpose.xlu0.b32.cont [2/16] %v445, 128
        %484 = vxpose.xlu0.b32.cont [3/16] 0.0, 128
        %485 = vxpose.xlu0.b32.cont [4/16] 0.0, 128
        %486 = vxpose.xlu0.b32.cont [5/16] 0.0, 128
        %487 = vxpose.xlu0.b32.cont [6/16] 0.0, 128
        %488 = vxpose.xlu0.b32.cont [7/16] 0.0, 128
        %489 = vxpose.xlu0.b32.cont [8/16] 0.0, 128
        %490 = vxpose.xlu0.b32.cont [9/16] 0.0, 128
        %491 = vxpose.xlu0.b32.cont [10/16] 0.0, 128
        %492 = vxpose.xlu0.b32.cont [11/16] 0.0, 128
        %493 = vxpose.xlu0.b32.cont [12/16] 0.0, 128
        %494 = vxpose.xlu0.b32.cont [13/16] 0.0, 128
        %495 = vxpose.xlu0.b32.cont [14/16] 0.0, 128
        %496 = vxpose.xlu0.b32.cont [15/16] 0.0, 128
        %497 = vxpose.xlu0.b32.end [16/16] 0.0, 128
        %v498 = vpop.trf.xlu0
        %v499 = vpop.trf.xlu0
        %v500 = vpop.trf.xlu0
        %v501 = vpop.trf.xlu0
        %v502 = vpop.trf.xlu0
        %v503 = vpop.trf.xlu0
        %v504 = vpop.trf.xlu0
        %v505 = vpop.trf.xlu0
        %v506 = vpop.trf.xlu0
        %v507 = vpop.trf.xlu0
        %v508 = vpop.trf.xlu0
        %v509 = vpop.trf.xlu0
        %v510 = vpop.trf.xlu0
        %v511 = vpop.trf.xlu0
        %v512 = vpop.trf.xlu0
        %v513 = vpop.trf.xlu0
        %514 = vxpose.xlu0.b32.start [1/16] %v448, 128
        %515 = vxpose.xlu0.b32.cont [2/16] %v450, 128
        %516 = vxpose.xlu0.b32.cont [3/16] 0.0, 128
        %517 = vxpose.xlu0.b32.cont [4/16] 0.0, 128
        %518 = vxpose.xlu0.b32.cont [5/16] 0.0, 128
        %519 = vxpose.xlu0.b32.cont [6/16] 0.0, 128
        %520 = vxpose.xlu0.b32.cont [7/16] 0.0, 128
        %521 = vxpose.xlu0.b32.cont [8/16] 0.0, 128
        %522 = vxpose.xlu0.b32.cont [9/16] 0.0, 128
        %523 = vxpose.xlu0.b32.cont [10/16] 0.0, 128
        %524 = vxpose.xlu0.b32.cont [11/16] 0.0, 128
        %525 = vxpose.xlu0.b32.cont [12/16] 0.0, 128
        %526 = vxpose.xlu0.b32.cont [13/16] 0.0, 128
        %527 = vxpose.xlu0.b32.cont [14/16] 0.0, 128
        %528 = vxpose.xlu0.b32.cont [15/16] 0.0, 128
        %529 = vxpose.xlu0.b32.end [16/16] 0.0, 128
        %v530 = vpop.trf.xlu0
        %v531 = vpop.trf.xlu0
        %v532 = vpop.trf.xlu0
        %v533 = vpop.trf.xlu0
        %v534 = vpop.trf.xlu0
        %v535 = vpop.trf.xlu0
        %v536 = vpop.trf.xlu0
        %v537 = vpop.trf.xlu0
        %v538 = vpop.trf.xlu0
        %v539 = vpop.trf.xlu0
        %v540 = vpop.trf.xlu0
        %v541 = vpop.trf.xlu0
        %v542 = vpop.trf.xlu0
        %v543 = vpop.trf.xlu0
        %v544 = vpop.trf.xlu0
        %v545 = vpop.trf.xlu0
        %546 = vxpose.xlu0.b32.start [1/16] %v453, 128
        %547 = vxpose.xlu0.b32.cont [2/16] %v455, 128
        %548 = vxpose.xlu0.b32.cont [3/16] 0.0, 128
        %549 = vxpose.xlu0.b32.cont [4/16] 0.0, 128
        %550 = vxpose.xlu0.b32.cont [5/16] 0.0, 128
        %551 = vxpose.xlu0.b32.cont [6/16] 0.0, 128
        %552 = vxpose.xlu0.b32.cont [7/16] 0.0, 128
        %553 = vxpose.xlu0.b32.cont [8/16] 0.0, 128
        %554 = vxpose.xlu0.b32.cont [9/16] 0.0, 128
        %555 = vxpose.xlu0.b32.cont [10/16] 0.0, 128
        %556 = vxpose.xlu0.b32.cont [11/16] 0.0, 128
        %557 = vxpose.xlu0.b32.cont [12/16] 0.0, 128
        %558 = vxpose.xlu0.b32.cont [13/16] 0.0, 128
        %559 = vxpose.xlu0.b32.cont [14/16] 0.0, 128
        %560 = vxpose.xlu0.b32.cont [15/16] 0.0, 128
        %561 = vxpose.xlu0.b32.end [16/16] 0.0, 128
        %v562 = vpop.trf.xlu0
        %v563 = vpop.trf.xlu0
        %v564 = vpop.trf.xlu0
        %v565 = vpop.trf.xlu0
        %v566 = vpop.trf.xlu0
        %v567 = vpop.trf.xlu0
        %v568 = vpop.trf.xlu0
        %v569 = vpop.trf.xlu0
        %v570 = vpop.trf.xlu0
        %v571 = vpop.trf.xlu0
        %v572 = vpop.trf.xlu0
        %v573 = vpop.trf.xlu0
        %v574 = vpop.trf.xlu0
        %v575 = vpop.trf.xlu0
        %v576 = vpop.trf.xlu0
        %v577 = vpop.trf.xlu0
        %578 = vxpose.xlu0.b32.start [1/16] %v458, 128
        %579 = vxpose.xlu0.b32.cont [2/16] %v460, 128
        %580 = vxpose.xlu0.b32.cont [3/16] 0.0, 128
        %581 = vxpose.xlu0.b32.cont [4/16] 0.0, 128
        %582 = vxpose.xlu0.b32.cont [5/16] 0.0, 128
        %583 = vxpose.xlu0.b32.cont [6/16] 0.0, 128
        %584 = vxpose.xlu0.b32.cont [7/16] 0.0, 128
        %585 = vxpose.xlu0.b32.cont [8/16] 0.0, 128
        %586 = vxpose.xlu0.b32.cont [9/16] 0.0, 128
        %587 = vxpose.xlu0.b32.cont [10/16] 0.0, 128
        %588 = vxpose.xlu0.b32.cont [11/16] 0.0, 128
        %589 = vxpose.xlu0.b32.cont [12/16] 0.0, 128
        %590 = vxpose.xlu0.b32.cont [13/16] 0.0, 128
        %591 = vxpose.xlu0.b32.cont [14/16] 0.0, 128
        %592 = vxpose.xlu0.b32.cont [15/16] 0.0, 128
        %593 = vxpose.xlu0.b32.end [16/16] 0.0, 128
        %v594 = vpop.trf.xlu0
        %v595 = vpop.trf.xlu0
        %v596 = vpop.trf.xlu0
        %v597 = vpop.trf.xlu0
        %v598 = vpop.trf.xlu0
        %v599 = vpop.trf.xlu0
        %v600 = vpop.trf.xlu0
        %v601 = vpop.trf.xlu0
        %v602 = vpop.trf.xlu0
        %v603 = vpop.trf.xlu0
        %v604 = vpop.trf.xlu0
        %v605 = vpop.trf.xlu0
        %v606 = vpop.trf.xlu0
        %v607 = vpop.trf.xlu0
        %v608 = vpop.trf.xlu0
        %v609 = vpop.trf.xlu0
        %610 = vxpose.xlu0.b32.start [1/16] %v463, 128
        %611 = vxpose.xlu0.b32.cont [2/16] %v465, 128
        %612 = vxpose.xlu0.b32.cont [3/16] 0.0, 128
        %613 = vxpose.xlu0.b32.cont [4/16] 0.0, 128
        %614 = vxpose.xlu0.b32.cont [5/16] 0.0, 128
        %615 = vxpose.xlu0.b32.cont [6/16] 0.0, 128
        %616 = vxpose.xlu0.b32.cont [7/16] 0.0, 128
        %617 = vxpose.xlu0.b32.cont [8/16] 0.0, 128
        %618 = vxpose.xlu0.b32.cont [9/16] 0.0, 128
        %619 = vxpose.xlu0.b32.cont [10/16] 0.0, 128
        %620 = vxpose.xlu0.b32.cont [11/16] 0.0, 128
        %621 = vxpose.xlu0.b32.cont [12/16] 0.0, 128
        %622 = vxpose.xlu0.b32.cont [13/16] 0.0, 128
        %623 = vxpose.xlu0.b32.cont [14/16] 0.0, 128
        %624 = vxpose.xlu0.b32.cont [15/16] 0.0, 128
        %625 = vxpose.xlu0.b32.end [16/16] 0.0, 128
        %v626 = vpop.trf.xlu0
        %v627 = vpop.trf.xlu0
        %v628 = vpop.trf.xlu0
        %v629 = vpop.trf.xlu0
        %v630 = vpop.trf.xlu0
        %v631 = vpop.trf.xlu0
        %v632 = vpop.trf.xlu0
        %v633 = vpop.trf.xlu0
        %v634 = vpop.trf.xlu0
        %v635 = vpop.trf.xlu0
        %v636 = vpop.trf.xlu0
        %v637 = vpop.trf.xlu0
        %v638 = vpop.trf.xlu0
        %v639 = vpop.trf.xlu0
        %v640 = vpop.trf.xlu0
        %v641 = vpop.trf.xlu0
        %642 = vxpose.xlu0.b32.start [1/16] %v468, 128
        %643 = vxpose.xlu0.b32.cont [2/16] %v470, 128
        %644 = vxpose.xlu0.b32.cont [3/16] 0.0, 128
        %645 = vxpose.xlu0.b32.cont [4/16] 0.0, 128
        %646 = vxpose.xlu0.b32.cont [5/16] 0.0, 128
        %647 = vxpose.xlu0.b32.cont [6/16] 0.0, 128
        %648 = vxpose.xlu0.b32.cont [7/16] 0.0, 128
        %649 = vxpose.xlu0.b32.cont [8/16] 0.0, 128
        %650 = vxpose.xlu0.b32.cont [9/16] 0.0, 128
        %651 = vxpose.xlu0.b32.cont [10/16] 0.0, 128
        %652 = vxpose.xlu0.b32.cont [11/16] 0.0, 128
        %653 = vxpose.xlu0.b32.cont [12/16] 0.0, 128
        %654 = vxpose.xlu0.b32.cont [13/16] 0.0, 128
        %655 = vxpose.xlu0.b32.cont [14/16] 0.0, 128
        %656 = vxpose.xlu0.b32.cont [15/16] 0.0, 128
        %657 = vxpose.xlu0.b32.end [16/16] 0.0, 128
        %v658 = vpop.trf.xlu0
        %v659 = vpop.trf.xlu0
        %v660 = vpop.trf.xlu0
        %v661 = vpop.trf.xlu0
        %v662 = vpop.trf.xlu0
        %v663 = vpop.trf.xlu0
        %v664 = vpop.trf.xlu0
        %v665 = vpop.trf.xlu0
        %v666 = vpop.trf.xlu0
        %v667 = vpop.trf.xlu0
        %v668 = vpop.trf.xlu0
        %v669 = vpop.trf.xlu0
        %v670 = vpop.trf.xlu0
        %v671 = vpop.trf.xlu0
        %v672 = vpop.trf.xlu0
        %v673 = vpop.trf.xlu0
        %674 = vxpose.xlu0.b32.start [1/16] %v473, 128
        %675 = vxpose.xlu0.b32.cont [2/16] %v475, 128
        %676 = vxpose.xlu0.b32.cont [3/16] 0.0, 128
        %677 = vxpose.xlu0.b32.cont [4/16] 0.0, 128
        %678 = vxpose.xlu0.b32.cont [5/16] 0.0, 128
        %679 = vxpose.xlu0.b32.cont [6/16] 0.0, 128
        %680 = vxpose.xlu0.b32.cont [7/16] 0.0, 128
        %681 = vxpose.xlu0.b32.cont [8/16] 0.0, 128
        %682 = vxpose.xlu0.b32.cont [9/16] 0.0, 128
        %683 = vxpose.xlu0.b32.cont [10/16] 0.0, 128
        %684 = vxpose.xlu0.b32.cont [11/16] 0.0, 128
        %685 = vxpose.xlu0.b32.cont [12/16] 0.0, 128
        %686 = vxpose.xlu0.b32.cont [13/16] 0.0, 128
        %687 = vxpose.xlu0.b32.cont [14/16] 0.0, 128
        %688 = vxpose.xlu0.b32.cont [15/16] 0.0, 128
        %689 = vxpose.xlu0.b32.end [16/16] 0.0, 128
        %v690 = vpop.trf.xlu0
        %v691 = vpop.trf.xlu0
        %v692 = vpop.trf.xlu0
        %v693 = vpop.trf.xlu0
        %v694 = vpop.trf.xlu0
        %v695 = vpop.trf.xlu0
        %v696 = vpop.trf.xlu0
        %v697 = vpop.trf.xlu0
        %v698 = vpop.trf.xlu0
        %v699 = vpop.trf.xlu0
        %v700 = vpop.trf.xlu0
        %v701 = vpop.trf.xlu0
        %v702 = vpop.trf.xlu0
        %v703 = vpop.trf.xlu0
        %v704 = vpop.trf.xlu0
        %v705 = vpop.trf.xlu0
        %706 = vxpose.xlu0.b32.start [1/16] %v478, 128
        %707 = vxpose.xlu0.b32.cont [2/16] %v480, 128
        %708 = vxpose.xlu0.b32.cont [3/16] 0.0, 128
        %709 = vxpose.xlu0.b32.cont [4/16] 0.0, 128
        %710 = vxpose.xlu0.b32.cont [5/16] 0.0, 128
        %711 = vxpose.xlu0.b32.cont [6/16] 0.0, 128
        %712 = vxpose.xlu0.b32.cont [7/16] 0.0, 128
        %713 = vxpose.xlu0.b32.cont [8/16] 0.0, 128
        %714 = vxpose.xlu0.b32.cont [9/16] 0.0, 128
        %715 = vxpose.xlu0.b32.cont [10/16] 0.0, 128
        %716 = vxpose.xlu0.b32.cont [11/16] 0.0, 128
        %717 = vxpose.xlu0.b32.cont [12/16] 0.0, 128
        %718 = vxpose.xlu0.b32.cont [13/16] 0.0, 128
        %719 = vxpose.xlu0.b32.cont [14/16] 0.0, 128
        %720 = vxpose.xlu0.b32.cont [15/16] 0.0, 128
        %721 = vxpose.xlu0.b32.end [16/16] 0.0, 128
        %v722 = vpop.trf.xlu0
        %v723 = vpop.trf.xlu0
        %v724 = vpop.trf.xlu0
        %v725 = vpop.trf.xlu0
        %v726 = vpop.trf.xlu0
        %v727 = vpop.trf.xlu0
        %v728 = vpop.trf.xlu0
        %v729 = vpop.trf.xlu0
        %v730 = vpop.trf.xlu0
        %v731 = vpop.trf.xlu0
        %v732 = vpop.trf.xlu0
        %v733 = vpop.trf.xlu0
        %v734 = vpop.trf.xlu0
        %v735 = vpop.trf.xlu0
        %v736 = vpop.trf.xlu0
        %v737 = vpop.trf.xlu0
        %v738 = vlaneseq
        %v739 = vand.u32 %v738, 127
        %s740 = smul.u32 %s20, 16
        %s741 = ssub.s32 65, %s740
        %v742 = vstv %s741
        %vm743 = vcmp.lt.s32.totalorder %v739, %v742
        %v744 = vsel %vm743, %v498, -inf
        %v745 = vsel %vm743, %v530, -inf
        %v746 = vsel %vm743, %v562, -inf
        %v747 = vsel %vm743, %v594, -inf
        %v748 = vsel %vm743, %v626, -inf
        %v749 = vsel %vm743, %v658, -inf
        %v750 = vsel %vm743, %v690, -inf
        %v751 = vsel %vm743, %v722, -inf
        %v752 = vld [vmem:[#allocation2] sm:$0xff]
        %vm753 = vcmask 125952
        %v754 = vsel %vm753, %v744, -inf
        %755 = vmax.xlane.f32.xlu0 %v754
        %v756 = vpop.xlane.xlu0 %755
        %v757 = vsel %vm753, %v745, -inf
        %758 = vmax.xlane.f32.xlu0 %v757
        %v759 = vpop.xlane.xlu0 %758
        %v760 = vsel %vm753, %v746, -inf
        %761 = vmax.xlane.f32.xlu0 %v760
        %v762 = vpop.xlane.xlu0 %761
        %v763 = vsel %vm753, %v747, -inf
        %764 = vmax.xlane.f32.xlu0 %v763
        %v765 = vpop.xlane.xlu0 %764
        %v766 = vsel %vm753, %v748, -inf
        %767 = vmax.xlane.f32.xlu0 %v766
        %v768 = vpop.xlane.xlu0 %767
        %v769 = vsel %vm753, %v749, -inf
        %770 = vmax.xlane.f32.xlu0 %v769
        %v771 = vpop.xlane.xlu0 %770
        %v772 = vsel %vm753, %v750, -inf
        %773 = vmax.xlane.f32.xlu0 %v772
        %v774 = vpop.xlane.xlu0 %773
        %v775 = vsel %vm753, %v751, -inf
        %776 = vmax.xlane.f32.xlu0 %v775
        %v777 = vpop.xlane.xlu0 %776
        %v786 = vperm.slane %v756, %v739
        %v787 = vperm.slane %v759, %v739
        %v788 = vperm.slane %v762, %v739
        %v789 = vperm.slane %v765, %v739
        %v790 = vperm.slane %v768, %v739
        %v791 = vperm.slane %v771, %v739
        %v792 = vperm.slane %v774, %v739
        %v793 = vperm.slane %v777, %v739
        %vm794 = vcmask 1041409
        %v795 = vsel %vm794, %v787, %v786
        %vm796 = vcmask 1042434
        %v797 = vsel %vm796, %v788, %v795
        %vm798 = vcmask 1043459
        %v799 = vsel %vm798, %v789, %v797
        %vm800 = vcmask 1044484
        %v801 = vsel %vm800, %v790, %v799
        %vm802 = vcmask 1045509
        %v803 = vsel %vm802, %v791, %v801
        %vm804 = vcmask 1046534
        %v805 = vsel %vm804, %v792, %v803
        %vm806 = vcmask 1047559
        %v807 = vsel %vm806, %v793, %v805
        %v809 = vmax.f32 %v752, %v807
        %v810 = vsub.f32 %v752, %v809
        %v811 = vmul.f32 %v810, 1.442695
        %v812 = vpow.pop %v811
        %v813 = vperm.slane %v809, 0
        %v814 = vlaneseq
        %v815 = vshrl.u32 %v814, 7
        %817 = vset.pattern.permute.xlu0 %v815
        %818 = vperm.xlu0 %817, %v813
        %v819 = vpop.permute.xlu0 %818
        %v820 = vperm.slane %v809, 1
        %v821 = vlaneseq
        %v822 = vshrl.u32 %v821, 7
        %824 = vset.pattern.permute.xlu0 %v822
        %825 = vperm.xlu0 %824, %v820
        %v826 = vpop.permute.xlu0 %825
        %v827 = vperm.slane %v809, 2
        %v828 = vlaneseq
        %v829 = vshrl.u32 %v828, 7
        %831 = vset.pattern.permute.xlu0 %v829
        %832 = vperm.xlu0 %831, %v827
        %v833 = vpop.permute.xlu0 %832
        %v834 = vperm.slane %v809, 3
        %v835 = vlaneseq
        %v836 = vshrl.u32 %v835, 7
        %838 = vset.pattern.permute.xlu0 %v836
        %839 = vperm.xlu0 %838, %v834
        %v840 = vpop.permute.xlu0 %839
        %v841 = vperm.slane %v809, 4
        %v842 = vlaneseq
        %v843 = vshrl.u32 %v842, 7
        %845 = vset.pattern.permute.xlu0 %v843
        %846 = vperm.xlu0 %845, %v841
        %v847 = vpop.permute.xlu0 %846
        %v848 = vperm.slane %v809, 5
        %v849 = vlaneseq
        %v850 = vshrl.u32 %v849, 7
        %852 = vset.pattern.permute.xlu0 %v850
        %853 = vperm.xlu0 %852, %v848
        %v854 = vpop.permute.xlu0 %853
        %v855 = vperm.slane %v809, 6
        %v856 = vlaneseq
        %v857 = vshrl.u32 %v856, 7
        %859 = vset.pattern.permute.xlu0 %v857
        %860 = vperm.xlu0 %859, %v855
        %v861 = vpop.permute.xlu0 %860
        %v862 = vperm.slane %v809, 7
        %v863 = vlaneseq
        %v864 = vshrl.u32 %v863, 7
        %866 = vset.pattern.permute.xlu0 %v864
        %867 = vperm.xlu0 %866, %v862
        %v868 = vpop.permute.xlu0 %867
        %v869 = vsub.f32 %v744, %v819
        %v870 = vsub.f32 %v745, %v826
        %v871 = vsub.f32 %v746, %v833
        %v872 = vsub.f32 %v747, %v840
        %v873 = vsub.f32 %v748, %v847
        %v874 = vsub.f32 %v749, %v854
        %v875 = vsub.f32 %v750, %v861
        %v876 = vsub.f32 %v751, %v868
        %v877 = vmul.f32 %v869, 1.442695
        %v878 = vpow.pop %v877
        %v879 = vmul.f32 %v870, 1.442695
        %v880 = vpow.pop %v879
        %v881 = vmul.f32 %v871, 1.442695
        %v882 = vpow.pop %v881
        %v883 = vmul.f32 %v872, 1.442695
        %v884 = vpow.pop %v883
        %v885 = vmul.f32 %v873, 1.442695
        %v886 = vpow.pop %v885
        %v887 = vmul.f32 %v874, 1.442695
        %v888 = vpow.pop %v887
        %v889 = vmul.f32 %v875, 1.442695
        %v890 = vpow.pop %v889
        %v891 = vmul.f32 %v876, 1.442695
        %v892 = vpow.pop %v891
        %v893 = vld [vmem:[#allocation3] sm:$0xff]
        %v894 = vmul.f32 %v812, %v893
        %v895 = vsel %vm753, %v878, 0.0
        %896 = vadd.xlane.f32.xlu0 %v895
        %v897 = vpop.xlane.xlu0 %896
        %v898 = vsel %vm753, %v880, 0.0
        %899 = vadd.xlane.f32.xlu0 %v898
        %v900 = vpop.xlane.xlu0 %899
        %v901 = vsel %vm753, %v882, 0.0
        %902 = vadd.xlane.f32.xlu0 %v901
        %v903 = vpop.xlane.xlu0 %902
        %v904 = vsel %vm753, %v884, 0.0
        %905 = vadd.xlane.f32.xlu0 %v904
        %v906 = vpop.xlane.xlu0 %905
        %v907 = vsel %vm753, %v886, 0.0
        %908 = vadd.xlane.f32.xlu0 %v907
        %v909 = vpop.xlane.xlu0 %908
        %v910 = vsel %vm753, %v888, 0.0
        %911 = vadd.xlane.f32.xlu0 %v910
        %v912 = vpop.xlane.xlu0 %911
        %v913 = vsel %vm753, %v890, 0.0
        %914 = vadd.xlane.f32.xlu0 %v913
        %v915 = vpop.xlane.xlu0 %914
        %v916 = vsel %vm753, %v892, 0.0
        %917 = vadd.xlane.f32.xlu0 %v916
        %v918 = vpop.xlane.xlu0 %917
        %v927 = vperm.slane %v897, %v739
        %v928 = vperm.slane %v900, %v739
        %v929 = vperm.slane %v903, %v739
        %v930 = vperm.slane %v906, %v739
        %v931 = vperm.slane %v909, %v739
        %v932 = vperm.slane %v912, %v739
        %v933 = vperm.slane %v915, %v739
        %v934 = vperm.slane %v918, %v739
        %v935 = vsel %vm794, %v928, %v927
        %v936 = vsel %vm796, %v929, %v935
        %v937 = vsel %vm798, %v930, %v936
        %v938 = vsel %vm800, %v931, %v937
        %v939 = vsel %vm802, %v932, %v938
        %v940 = vsel %vm804, %v933, %v939
        %v941 = vsel %vm806, %v934, %v940
        %v943 = vadd.f32 %v894, %v941
        %vm944 = vcmask 31744
        %945 = vst.msk [vmem:[#allocation3] sm:$0xff] %vm944, %v943
        %v946 = vpack.c.bf16 %v878, %v878
        %v947 = vpack.c.bf16 %v880, %v880
        %v948 = vpack.c.bf16 %v882, %v882
        %v949 = vpack.c.bf16 %v884, %v884
        %v950 = vpack.c.bf16 %v886, %v886
        %v951 = vpack.c.bf16 %v888, %v888
        %v952 = vpack.c.bf16 %v890, %v890
        %v953 = vpack.c.bf16 %v892, %v892
        %vm955 = vcmask 130048
        %v957 = vsel %vm955, %v946, 0
        %959 = vmatpush.bf16.msra.mxu0 0
        %960 = vmatpush.bf16.msra.mxu0 0
        %961 = vmatpush.bf16.msra.mxu0 0
        %962 = vmatpush.bf16.msra.mxu0 0
        %963 = vmatpush.bf16.msra.mxu0 0
        %964 = vmatpush.bf16.msra.mxu0 0
        %965 = vmatpush.bf16.msra.mxu0 0
        %966 = vmatpush.bf16.msra.mxu0 %v388
        %967 = vmatmul.bf16.gmra.mxu0 %v957
        %v968 = vpop.f32.mrf.mxu0
        %v969 = vadd.f32 0.0, %v968
        %v970 = vpop.f32.mrf.mxu0
        %971 = vdwg.mxu0
        %v974 = vsel %vm955, %v947, 0
        %976 = vmatpush.bf16.msra.mxu0 0
        %977 = vmatpush.bf16.msra.mxu0 0
        %978 = vmatpush.bf16.msra.mxu0 0
        %979 = vmatpush.bf16.msra.mxu0 0
        %980 = vmatpush.bf16.msra.mxu0 0
        %981 = vmatpush.bf16.msra.mxu0 0
        %982 = vmatpush.bf16.msra.mxu0 0
        %983 = vmatpush.bf16.msra.mxu0 %v389
        %984 = vmatmul.bf16.gmra.mxu0 %v974
        %v985 = vpop.f32.mrf.mxu0
        %v986 = vadd.f32 0.0, %v985
        %v987 = vpop.f32.mrf.mxu0
        %988 = vdwg.mxu0
        %v991 = vsel %vm955, %v948, 0
        %993 = vmatpush.bf16.msra.mxu0 0
        %994 = vmatpush.bf16.msra.mxu0 0
        %995 = vmatpush.bf16.msra.mxu0 0
        %996 = vmatpush.bf16.msra.mxu0 0
        %997 = vmatpush.bf16.msra.mxu0 0
        %998 = vmatpush.bf16.msra.mxu0 0
        %999 = vmatpush.bf16.msra.mxu0 0
        %1000 = vmatpush.bf16.msra.mxu0 %v390
        %1001 = vmatmul.bf16.gmra.mxu0 %v991
        %v1002 = vpop.f32.mrf.mxu0
        %v1003 = vadd.f32 0.0, %v1002
        %v1004 = vpop.f32.mrf.mxu0
        %1005 = vdwg.mxu0
        %v1008 = vsel %vm955, %v949, 0
        %1010 = vmatpush.bf16.msra.mxu0 0
        %1011 = vmatpush.bf16.msra.mxu0 0
        %1012 = vmatpush.bf16.msra.mxu0 0
        %1013 = vmatpush.bf16.msra.mxu0 0
        %1014 = vmatpush.bf16.msra.mxu0 0
        %1015 = vmatpush.bf16.msra.mxu0 0
        %1016 = vmatpush.bf16.msra.mxu0 0
        %1017 = vmatpush.bf16.msra.mxu0 %v391
        %1018 = vmatmul.bf16.gmra.mxu0 %v1008
        %v1019 = vpop.f32.mrf.mxu0
        %v1020 = vadd.f32 0.0, %v1019
        %v1021 = vpop.f32.mrf.mxu0
        %1022 = vdwg.mxu0
        %v1025 = vsel %vm955, %v950, 0
        %1027 = vmatpush.bf16.msra.mxu0 0
        %1028 = vmatpush.bf16.msra.mxu0 0
        %1029 = vmatpush.bf16.msra.mxu0 0
        %1030 = vmatpush.bf16.msra.mxu0 0
        %1031 = vmatpush.bf16.msra.mxu0 0
        %1032 = vmatpush.bf16.msra.mxu0 0
        %1033 = vmatpush.bf16.msra.mxu0 0
        %1034 = vmatpush.bf16.msra.mxu0 %v392
        %1035 = vmatmul.bf16.gmra.mxu0 %v1025
        %v1036 = vpop.f32.mrf.mxu0
        %v1037 = vadd.f32 0.0, %v1036
        %v1038 = vpop.f32.mrf.mxu0
        %1039 = vdwg.mxu0
        %v1042 = vsel %vm955, %v951, 0
        %1044 = vmatpush.bf16.msra.mxu0 0
        %1045 = vmatpush.bf16.msra.mxu0 0
        %1046 = vmatpush.bf16.msra.mxu0 0
        %1047 = vmatpush.bf16.msra.mxu0 0
        %1048 = vmatpush.bf16.msra.mxu0 0
        %1049 = vmatpush.bf16.msra.mxu0 0
        %1050 = vmatpush.bf16.msra.mxu0 0
        %1051 = vmatpush.bf16.msra.mxu0 %v393
        %1052 = vmatmul.bf16.gmra.mxu0 %v1042
        %v1053 = vpop.f32.mrf.mxu0
        %v1054 = vadd.f32 0.0, %v1053
        %v1055 = vpop.f32.mrf.mxu0
        %1056 = vdwg.mxu0
        %v1059 = vsel %vm955, %v952, 0
        %1061 = vmatpush.bf16.msra.mxu0 0
        %1062 = vmatpush.bf16.msra.mxu0 0
        %1063 = vmatpush.bf16.msra.mxu0 0
        %1064 = vmatpush.bf16.msra.mxu0 0
        %1065 = vmatpush.bf16.msra.mxu0 0
        %1066 = vmatpush.bf16.msra.mxu0 0
        %1067 = vmatpush.bf16.msra.mxu0 0
        %1068 = vmatpush.bf16.msra.mxu0 %v394
        %1069 = vmatmul.bf16.gmra.mxu0 %v1059
        %v1070 = vpop.f32.mrf.mxu0
        %v1071 = vadd.f32 0.0, %v1070
        %v1072 = vpop.f32.mrf.mxu0
        %1073 = vdwg.mxu0
        %v1076 = vsel %vm955, %v953, 0
        %1078 = vmatpush.bf16.msra.mxu0 0
        %1079 = vmatpush.bf16.msra.mxu0 0
        %1080 = vmatpush.bf16.msra.mxu0 0
        %1081 = vmatpush.bf16.msra.mxu0 0
        %1082 = vmatpush.bf16.msra.mxu0 0
        %1083 = vmatpush.bf16.msra.mxu0 0
        %1084 = vmatpush.bf16.msra.mxu0 0
        %1085 = vmatpush.bf16.msra.mxu0 %v395
        %1086 = vmatmul.bf16.gmra.mxu0 %v1076
        %v1087 = vpop.f32.mrf.mxu0
        %v1088 = vadd.f32 0.0, %v1087
        %v1089 = vpop.f32.mrf.mxu0
        %1090 = vdwg.mxu0
        %v1091 = vperm.slane %v812, 0
        %v1092 = vlaneseq
        %v1093 = vshrl.u32 %v1092, 7
        %1095 = vset.pattern.permute.xlu0 %v1093
        %1096 = vperm.xlu0 %1095, %v1091
        %v1097 = vpop.permute.xlu0 %1096
        %v1098 = vperm.slane %v812, 1
        %v1099 = vlaneseq
        %v1100 = vshrl.u32 %v1099, 7
        %1102 = vset.pattern.permute.xlu0 %v1100
        %1103 = vperm.xlu0 %1102, %v1098
        %v1104 = vpop.permute.xlu0 %1103
        %v1105 = vperm.slane %v812, 2
        %v1106 = vlaneseq
        %v1107 = vshrl.u32 %v1106, 7
        %1109 = vset.pattern.permute.xlu0 %v1107
        %1110 = vperm.xlu0 %1109, %v1105
        %v1111 = vpop.permute.xlu0 %1110
        %v1112 = vperm.slane %v812, 3
        %v1113 = vlaneseq
        %v1114 = vshrl.u32 %v1113, 7
        %1116 = vset.pattern.permute.xlu0 %v1114
        %1117 = vperm.xlu0 %1116, %v1112
        %v1118 = vpop.permute.xlu0 %1117
        %v1119 = vperm.slane %v812, 4
        %v1120 = vlaneseq
        %v1121 = vshrl.u32 %v1120, 7
        %1123 = vset.pattern.permute.xlu0 %v1121
        %1124 = vperm.xlu0 %1123, %v1119
        %v1125 = vpop.permute.xlu0 %1124
        %v1126 = vperm.slane %v812, 5
        %v1127 = vlaneseq
        %v1128 = vshrl.u32 %v1127, 7
        %1130 = vset.pattern.permute.xlu0 %v1128
        %1131 = vperm.xlu0 %1130, %v1126
        %v1132 = vpop.permute.xlu0 %1131
        %v1133 = vperm.slane %v812, 6
        %v1134 = vlaneseq
        %v1135 = vshrl.u32 %v1134, 7
        %1137 = vset.pattern.permute.xlu0 %v1135
        %1138 = vperm.xlu0 %1137, %v1133
        %v1139 = vpop.permute.xlu0 %1138
        %v1140 = vperm.slane %v812, 7
        %v1141 = vlaneseq
        %v1142 = vshrl.u32 %v1141, 7
        %1144 = vset.pattern.permute.xlu0 %v1142
        %1145 = vperm.xlu0 %1144, %v1140
        %v1146 = vpop.permute.xlu0 %1145
        %v1147 = vld [vmem:[#allocation4] sm:$0xf]
        %v1148 = vld [vmem:[#allocation4 + $0x4] sm:$0xf]
        %v1149 = vld [vmem:[#allocation4 + $0x8] sm:$0xf]
        %v1150 = vld [vmem:[#allocation4 + $0xc] sm:$0xf]
        %v1151 = vld [vmem:[#allocation4 + $0x10] sm:$0xf]
        %v1152 = vld [vmem:[#allocation4 + $0x14] sm:$0xf]
        %v1153 = vld [vmem:[#allocation4 + $0x18] sm:$0xf]
        %v1154 = vld [vmem:[#allocation4 + $0x1c] sm:$0xf]
        %v1155 = vmul.f32 %v1097, %v1147
        %v1156 = vmul.f32 %v1104, %v1148
        %v1157 = vmul.f32 %v1111, %v1149
        %v1158 = vmul.f32 %v1118, %v1150
        %v1159 = vmul.f32 %v1125, %v1151
        %v1160 = vmul.f32 %v1132, %v1152
        %v1161 = vmul.f32 %v1139, %v1153
        %v1162 = vmul.f32 %v1146, %v1154
        %v1163 = vadd.f32 %v1155, %v969
        %v1164 = vadd.f32 %v1156, %v986
        %v1165 = vadd.f32 %v1157, %v1003
        %v1166 = vadd.f32 %v1158, %v1020
        %v1167 = vadd.f32 %v1159, %v1037
        %v1168 = vadd.f32 %v1160, %v1054
        %v1169 = vadd.f32 %v1161, %v1071
        %v1170 = vadd.f32 %v1162, %v1088
        %vm1171 = vcmask 257024
        %1172 = vst.msk [vmem:[#allocation4] sm:$0xf] %vm1171, %v1163
        %1173 = vst.msk [vmem:[#allocation4 + $0x4] sm:$0xf] %vm1171, %v1164
        %1174 = vst.msk [vmem:[#allocation4 + $0x8] sm:$0xf] %vm1171, %v1165
        %1175 = vst.msk [vmem:[#allocation4 + $0xc] sm:$0xf] %vm1171, %v1166
        %1176 = vst.msk [vmem:[#allocation4 + $0x10] sm:$0xf] %vm1171, %v1167
        %1177 = vst.msk [vmem:[#allocation4 + $0x14] sm:$0xf] %vm1171, %v1168
        %1178 = vst.msk [vmem:[#allocation4 + $0x18] sm:$0xf] %vm1171, %v1169
        %1179 = vst.msk [vmem:[#allocation4 + $0x1c] sm:$0xf] %vm1171, %v1170
        %1180 = vst.msk [vmem:[#allocation2] sm:$0xff] %vm944, %v809
        %p1181 = scmp.eq.s32.totalorder %s20, 4
        // Predicated region
        $region82: #{tpu_custom_call.1} parent=72 // pred_check
          %p1182 = pneg %p1181
        $region83: #{tpu_custom_call.1} parent=72 // pred_check_branch
          %1184 = sbr.rel (%p1182) target = $region85
        $region84: #{tpu_custom_call.1} parent=72 // pred_region
          %v1185 = vld [vmem:[#allocation4] sm:$0xf]
          %v1186 = vld [vmem:[#allocation4 + $0x4] sm:$0xf]
          %v1187 = vld [vmem:[#allocation4 + $0x8] sm:$0xf]
          %v1188 = vld [vmem:[#allocation4 + $0xc] sm:$0xf]
          %v1189 = vld [vmem:[#allocation4 + $0x10] sm:$0xf]
          %v1190 = vld [vmem:[#allocation4 + $0x14] sm:$0xf]
          %v1191 = vld [vmem:[#allocation4 + $0x18] sm:$0xf]
          %v1192 = vld [vmem:[#allocation4 + $0x1c] sm:$0xf]
          %v1193 = vld [vmem:[#allocation3] sm:$0xff]
          %v1194 = vperm.slane %v1193, 0
          %v1195 = vlaneseq
          %v1196 = vshrl.u32 %v1195, 7
          %1198 = vset.pattern.permute.xlu0 %v1196
          %1199 = vperm.xlu0 %1198, %v1194
          %v1200 = vpop.permute.xlu0 %1199
          %v1201 = vperm.slane %v1193, 1
          %v1202 = vlaneseq
          %v1203 = vshrl.u32 %v1202, 7
          %1205 = vset.pattern.permute.xlu0 %v1203
          %1206 = vperm.xlu0 %1205, %v1201
          %v1207 = vpop.permute.xlu0 %1206
          %v1208 = vperm.slane %v1193, 2
          %v1209 = vlaneseq
          %v1210 = vshrl.u32 %v1209, 7
          %1212 = vset.pattern.permute.xlu0 %v1210
          %1213 = vperm.xlu0 %1212, %v1208
          %v1214 = vpop.permute.xlu0 %1213
          %v1215 = vperm.slane %v1193, 3
          %v1216 = vlaneseq
          %v1217 = vshrl.u32 %v1216, 7
          %1219 = vset.pattern.permute.xlu0 %v1217
          %1220 = vperm.xlu0 %1219, %v1215
          %v1221 = vpop.permute.xlu0 %1220
          %v1222 = vperm.slane %v1193, 4
          %v1223 = vlaneseq
          %v1224 = vshrl.u32 %v1223, 7
          %1226 = vset.pattern.permute.xlu0 %v1224
          %1227 = vperm.xlu0 %1226, %v1222
          %v1228 = vpop.permute.xlu0 %1227
          %v1229 = vperm.slane %v1193, 5
          %v1230 = vlaneseq
          %v1231 = vshrl.u32 %v1230, 7
          %1233 = vset.pattern.permute.xlu0 %v1231
          %1234 = vperm.xlu0 %1233, %v1229
          %v1235 = vpop.permute.xlu0 %1234
          %v1236 = vperm.slane %v1193, 6
          %v1237 = vlaneseq
          %v1238 = vshrl.u32 %v1237, 7
          %1240 = vset.pattern.permute.xlu0 %v1238
          %1241 = vperm.xlu0 %1240, %v1236
          %v1242 = vpop.permute.xlu0 %1241
          %v1243 = vperm.slane %v1193, 7
          %v1244 = vlaneseq
          %v1245 = vshrl.u32 %v1244, 7
          %1247 = vset.pattern.permute.xlu0 %v1245
          %1248 = vperm.xlu0 %1247, %v1243
          %v1249 = vpop.permute.xlu0 %1248
          %v1250 = vrcp.pop %v1200
          %v1251 = vmul.f32 %v1200, %v1250
          %v1252 = vsub.f32 1.0, %v1251
          %v1253 = vmul.f32 %v1250, %v1252
          %v1254 = vadd.f32 %v1250, %v1253
          %vm1255 = vweird.f32 %v1200
          %vm1256 = vweird.f32 %v1250
          %vm1257 = vmor %vm1255, %vm1256
          %v1258 = vsel %vm1257, %v1250, %v1254
          %v1259 = vand.u32 2147483647, %v1200
          %vm1260 = vcmp.eq.f32.partialorder %v1259, 8.507059e+37
          %v1261 = vand.u32 %v1200, 2147483648
          %v1262 = vor.u32 1.1754944e-38, %v1261
          %v1263 = vsel %vm1260, %v1262, %v1258
          %v1264 = vmul.f32 %v1185, %v1263
          %v1265 = vrcp.pop %v1207
          %v1266 = vmul.f32 %v1207, %v1265
          %v1267 = vsub.f32 1.0, %v1266
          %v1268 = vmul.f32 %v1265, %v1267
          %v1269 = vadd.f32 %v1265, %v1268
          %vm1270 = vweird.f32 %v1207
          %vm1271 = vweird.f32 %v1265
          %vm1272 = vmor %vm1270, %vm1271
          %v1273 = vsel %vm1272, %v1265, %v1269
          %v1274 = vand.u32 2147483647, %v1207
          %vm1275 = vcmp.eq.f32.partialorder %v1274, 8.507059e+37
          %v1276 = vand.u32 %v1207, 2147483648
          %v1277 = vor.u32 1.1754944e-38, %v1276
          %v1278 = vsel %vm1275, %v1277, %v1273
          %v1279 = vmul.f32 %v1186, %v1278
          %v1280 = vrcp.pop %v1214
          %v1281 = vmul.f32 %v1214, %v1280
          %v1282 = vsub.f32 1.0, %v1281
          %v1283 = vmul.f32 %v1280, %v1282
          %v1284 = vadd.f32 %v1280, %v1283
          %vm1285 = vweird.f32 %v1214
          %vm1286 = vweird.f32 %v1280
          %vm1287 = vmor %vm1285, %vm1286
          %v1288 = vsel %vm1287, %v1280, %v1284
          %v1289 = vand.u32 2147483647, %v1214
          %vm1290 = vcmp.eq.f32.partialorder %v1289, 8.507059e+37
          %v1291 = vand.u32 %v1214, 2147483648
          %v1292 = vor.u32 1.1754944e-38, %v1291
          %v1293 = vsel %vm1290, %v1292, %v1288
          %v1294 = vmul.f32 %v1187, %v1293
          %v1295 = vrcp.pop %v1221
          %v1296 = vmul.f32 %v1221, %v1295
          %v1297 = vsub.f32 1.0, %v1296
          %v1298 = vmul.f32 %v1295, %v1297
          %v1299 = vadd.f32 %v1295, %v1298
          %vm1300 = vweird.f32 %v1221
          %vm1301 = vweird.f32 %v1295
          %vm1302 = vmor %vm1300, %vm1301
          %v1303 = vsel %vm1302, %v1295, %v1299
          %v1304 = vand.u32 2147483647, %v1221
          %vm1305 = vcmp.eq.f32.partialorder %v1304, 8.507059e+37
          %v1306 = vand.u32 %v1221, 2147483648
          %v1307 = vor.u32 1.1754944e-38, %v1306
          %v1308 = vsel %vm1305, %v1307, %v1303
          %v1309 = vmul.f32 %v1188, %v1308
          %v1310 = vrcp.pop %v1228
          %v1311 = vmul.f32 %v1228, %v1310
          %v1312 = vsub.f32 1.0, %v1311
          %v1313 = vmul.f32 %v1310, %v1312
          %v1314 = vadd.f32 %v1310, %v1313
          %vm1315 = vweird.f32 %v1228
          %vm1316 = vweird.f32 %v1310
          %vm1317 = vmor %vm1315, %vm1316
          %v1318 = vsel %vm1317, %v1310, %v1314
          %v1319 = vand.u32 2147483647, %v1228
          %vm1320 = vcmp.eq.f32.partialorder %v1319, 8.507059e+37
          %v1321 = vand.u32 %v1228, 2147483648
          %v1322 = vor.u32 1.1754944e-38, %v1321
          %v1323 = vsel %vm1320, %v1322, %v1318
          %v1324 = vmul.f32 %v1189, %v1323
          %v1325 = vrcp.pop %v1235
          %v1326 = vmul.f32 %v1235, %v1325
          %v1327 = vsub.f32 1.0, %v1326
          %v1328 = vmul.f32 %v1325, %v1327
          %v1329 = vadd.f32 %v1325, %v1328
          %vm1330 = vweird.f32 %v1235
          %vm1331 = vweird.f32 %v1325
          %vm1332 = vmor %vm1330, %vm1331
          %v1333 = vsel %vm1332, %v1325, %v1329
          %v1334 = vand.u32 2147483647, %v1235
          %vm1335 = vcmp.eq.f32.partialorder %v1334, 8.507059e+37
          %v1336 = vand.u32 %v1235, 2147483648
          %v1337 = vor.u32 1.1754944e-38, %v1336
          %v1338 = vsel %vm1335, %v1337, %v1333
          %v1339 = vmul.f32 %v1190, %v1338
          %v1340 = vrcp.pop %v1242
          %v1341 = vmul.f32 %v1242, %v1340
          %v1342 = vsub.f32 1.0, %v1341
          %v1343 = vmul.f32 %v1340, %v1342
          %v1344 = vadd.f32 %v1340, %v1343
          %vm1345 = vweird.f32 %v1242
          %vm1346 = vweird.f32 %v1340
          %vm1347 = vmor %vm1345, %vm1346
          %v1348 = vsel %vm1347, %v1340, %v1344
          %v1349 = vand.u32 2147483647, %v1242
          %vm1350 = vcmp.eq.f32.partialorder %v1349, 8.507059e+37
          %v1351 = vand.u32 %v1242, 2147483648
          %v1352 = vor.u32 1.1754944e-38, %v1351
          %v1353 = vsel %vm1350, %v1352, %v1348
          %v1354 = vmul.f32 %v1191, %v1353
          %v1355 = vrcp.pop %v1249
          %v1356 = vmul.f32 %v1249, %v1355
          %v1357 = vsub.f32 1.0, %v1356
          %v1358 = vmul.f32 %v1355, %v1357
          %v1359 = vadd.f32 %v1355, %v1358
          %vm1360 = vweird.f32 %v1249
          %vm1361 = vweird.f32 %v1355
          %vm1362 = vmor %vm1360, %vm1361
          %v1363 = vsel %vm1362, %v1355, %v1359
          %v1364 = vand.u32 2147483647, %v1249
          %vm1365 = vcmp.eq.f32.partialorder %v1364, 8.507059e+37
          %v1366 = vand.u32 %v1249, 2147483648
          %v1367 = vor.u32 1.1754944e-38, %v1366
          %v1368 = vsel %vm1365, %v1367, %v1363
          %v1369 = vmul.f32 %v1192, %v1368
          %v1370 = vld [vmem:[%s2] sm:$0xff]
          %v1371 = vld [vmem:[%s2 + $0x8] sm:$0xff]
          %v1372 = vld [vmem:[%s2 + $0x10] sm:$0xff]
          %v1373 = vld [vmem:[%s2 + $0x18] sm:$0xff]
          %s1374 = scalar_lea.vmem %s2, 32
          %v1375 = vld [vmem:[%s1374] sm:$0xff]
          %v1376 = vld [vmem:[%s1374 + $0x8] sm:$0xff]
          %v1377 = vld [vmem:[%s1374 + $0x10] sm:$0xff]
          %v1378 = vld [vmem:[%s1374 + $0x18] sm:$0xff]
          %v1387 = vrot.slane %v1264, 1
          %v1388 = vsel %vm794, %v1279, %v1387
          %v1389 = vrot.slane %v1294, 7
          %v1390 = vsel %vm796, %v1389, %v1388
          %v1391 = vrot.slane %v1309, 6
          %v1392 = vsel %vm798, %v1391, %v1390
          %v1393 = vrot.slane %v1324, 5
          %v1394 = vsel %vm800, %v1393, %v1392
          %v1395 = vrot.slane %v1339, 4
          %v1396 = vsel %vm802, %v1395, %v1394
          %v1397 = vrot.slane %v1354, 3
          %v1398 = vsel %vm804, %v1397, %v1396
          %v1399 = vrot.slane %v1369, 2
          %v1400 = vsel %vm806, %v1399, %v1398
          %v1401 = vsel %vm408, %v1400, 0
          %1403 = vmatpush.msra.mxu0 0.0
          %1404 = vmatpush.msra.mxu0 0.0
          %1405 = vmatpush.msra.mxu0 0.0
          %1406 = vmatpush.msra.mxu0 0.0
          %1407 = vmatpush.msra.mxu0 0.0
          %1408 = vmatpush.msra.mxu0 0.0
          %1409 = vmatpush.msra.mxu0 0.0
          %1410 = vmatpush.msra.mxu0 0.0
          %1411 = vmatpush.msra.mxu0 0.0
          %1412 = vmatpush.msra.mxu0 0.0
          %1413 = vmatpush.msra.mxu0 0.0
          %1414 = vmatpush.msra.mxu0 0.0
          %1415 = vmatpush.msra.mxu0 %v1378
          %1416 = vmatpush.msra.mxu0 %v1377
          %1417 = vmatpush.msra.mxu0 %v1376
          %1418 = vmatpush.msra.mxu0 %v1375
          %1419 = vmatmul.f32.gmra.mxu0 %v1401
          %v1420 = vpop.f32.mrf.mxu0
          %v1421 = vadd.f32 0.0, %v1420
          %1422 = vdwg.mxu0
          %v1423 = vrot.slane %v1279, 7
          %v1424 = vsel %vm794, %v1423, %v1264
          %v1425 = vrot.slane %v1294, 6
          %v1426 = vsel %vm796, %v1425, %v1424
          %v1427 = vrot.slane %v1309, 5
          %v1428 = vsel %vm798, %v1427, %v1426
          %v1429 = vrot.slane %v1324, 4
          %v1430 = vsel %vm800, %v1429, %v1428
          %v1431 = vrot.slane %v1339, 3
          %v1432 = vsel %vm802, %v1431, %v1430
          %v1433 = vrot.slane %v1354, 2
          %v1434 = vsel %vm804, %v1433, %v1432
          %v1435 = vrot.slane %v1369, 1
          %v1436 = vsel %vm806, %v1435, %v1434
          %v1437 = vsel %vm408, %v1436, 0
          %1439 = vmatpush.msra.mxu0 0.0
          %1440 = vmatpush.msra.mxu0 0.0
          %1441 = vmatpush.msra.mxu0 0.0
          %1442 = vmatpush.msra.mxu0 0.0
          %1443 = vmatpush.msra.mxu0 0.0
          %1444 = vmatpush.msra.mxu0 0.0
          %1445 = vmatpush.msra.mxu0 0.0
          %1446 = vmatpush.msra.mxu0 0.0
          %1447 = vmatpush.msra.mxu0 0.0
          %1448 = vmatpush.msra.mxu0 0.0
          %1449 = vmatpush.msra.mxu0 0.0
          %1450 = vmatpush.msra.mxu0 0.0
          %1451 = vmatpush.msra.mxu0 %v1373
          %1452 = vmatpush.msra.mxu0 %v1372
          %1453 = vmatpush.msra.mxu0 %v1371
          %1454 = vmatpush.msra.mxu0 %v1370
          %1455 = vmatmul.f32.gmra.mxu0 %v1437
          %v1456 = vpop.f32.mrf.mxu0
          %v1457 = vadd.f32 %v1421, %v1456
          %1458 = vdwg.mxu0
          %s1459 = scalar_lea.vmem %s2, 64
          %v1460 = vld [vmem:[%s1459] sm:$0xff]
          %v1461 = vld [vmem:[%s1459 + $0x8] sm:$0xff]
          %v1462 = vld [vmem:[%s1459 + $0x10] sm:$0xff]
          %v1463 = vld [vmem:[%s1459 + $0x18] sm:$0xff]
          %v1464 = vrot.slane %v1264, 2
          %v1465 = vrot.slane %v1279, 1
          %v1466 = vsel %vm794, %v1465, %v1464
          %v1467 = vsel %vm796, %v1294, %v1466
          %v1468 = vrot.slane %v1309, 7
          %v1469 = vsel %vm798, %v1468, %v1467
          %v1470 = vrot.slane %v1324, 6
          %v1471 = vsel %vm800, %v1470, %v1469
          %v1472 = vrot.slane %v1339, 5
          %v1473 = vsel %vm802, %v1472, %v1471
          %v1474 = vrot.slane %v1354, 4
          %v1475 = vsel %vm804, %v1474, %v1473
          %v1476 = vrot.slane %v1369, 3
          %v1477 = vsel %vm806, %v1476, %v1475
          %v1478 = vsel %vm408, %v1477, 0
          %1480 = vmatpush.msra.mxu0 0.0
          %1481 = vmatpush.msra.mxu0 0.0
          %1482 = vmatpush.msra.mxu0 0.0
          %1483 = vmatpush.msra.mxu0 0.0
          %1484 = vmatpush.msra.mxu0 0.0
          %1485 = vmatpush.msra.mxu0 0.0
          %1486 = vmatpush.msra.mxu0 0.0
          %1487 = vmatpush.msra.mxu0 0.0
          %1488 = vmatpush.msra.mxu0 0.0
          %1489 = vmatpush.msra.mxu0 0.0
          %1490 = vmatpush.msra.mxu0 0.0
          %1491 = vmatpush.msra.mxu0 0.0
          %1492 = vmatpush.msra.mxu0 %v1463
          %1493 = vmatpush.msra.mxu0 %v1462
          %1494 = vmatpush.msra.mxu0 %v1461
          %1495 = vmatpush.msra.mxu0 %v1460
          %1496 = vmatmul.f32.gmra.mxu0 %v1478
          %v1497 = vpop.f32.mrf.mxu0
          %v1498 = vadd.f32 0.0, %v1497
          %1499 = vdwg.mxu0
          %v1500 = vadd.f32 %v1457, %v1498
          %s1501 = scalar_lea.vmem %s2, 96
          %v1502 = vld [vmem:[%s1501] sm:$0xff]
          %v1503 = vld [vmem:[%s1501 + $0x8] sm:$0xff]
          %v1504 = vld [vmem:[%s1501 + $0x10] sm:$0xff]
          %v1505 = vld [vmem:[%s1501 + $0x18] sm:$0xff]
          %v1506 = vrot.slane %v1264, 3
          %v1507 = vrot.slane %v1279, 2
          %v1508 = vsel %vm794, %v1507, %v1506
          %v1509 = vrot.slane %v1294, 1
          %v1510 = vsel %vm796, %v1509, %v1508
          %v1511 = vsel %vm798, %v1309, %v1510
          %v1512 = vrot.slane %v1324, 7
          %v1513 = vsel %vm800, %v1512, %v1511
          %v1514 = vrot.slane %v1339, 6
          %v1515 = vsel %vm802, %v1514, %v1513
          %v1516 = vrot.slane %v1354, 5
          %v1517 = vsel %vm804, %v1516, %v1515
          %v1518 = vrot.slane %v1369, 4
          %v1519 = vsel %vm806, %v1518, %v1517
          %v1520 = vsel %vm408, %v1519, 0
          %1522 = vmatpush.msra.mxu0 0.0
          %1523 = vmatpush.msra.mxu0 0.0
          %1524 = vmatpush.msra.mxu0 0.0
          %1525 = vmatpush.msra.mxu0 0.0
          %1526 = vmatpush.msra.mxu0 0.0
          %1527 = vmatpush.msra.mxu0 0.0
          %1528 = vmatpush.msra.mxu0 0.0
          %1529 = vmatpush.msra.mxu0 0.0
          %1530 = vmatpush.msra.mxu0 0.0
          %1531 = vmatpush.msra.mxu0 0.0
          %1532 = vmatpush.msra.mxu0 0.0
          %1533 = vmatpush.msra.mxu0 0.0
          %1534 = vmatpush.msra.mxu0 %v1505
          %1535 = vmatpush.msra.mxu0 %v1504
          %1536 = vmatpush.msra.mxu0 %v1503
          %1537 = vmatpush.msra.mxu0 %v1502
          %1538 = vmatmul.f32.gmra.mxu0 %v1520
          %v1539 = vpop.f32.mrf.mxu0
          %v1540 = vadd.f32 0.0, %v1539
          %1541 = vdwg.mxu0
          %v1542 = vadd.f32 %v1500, %v1540
          %v1543 = vld [vmem:[%s3] sm:$0x1]
          %v1545 = vperm.slane %v1543, 0
          %v1547 = vadd.f32 %v1542, %v1545
          %vm1548 = vcmask 15360
          %1549 = vst.msk [vmem:[%s318] sm:$0xff] %vm1548, %v1547
        $region85: #{tpu_custom_call.1} parent=72 // pred_fallthru
          _
        %p1550 = scmp.lt.s32.totalorder %s19, 0
        %s1551 = scalar_select %p1550, %s19, 0
        %s1552 = smul.addr %s1551, 8
        %s1553 = scalar_lea.vmem %s4, %s1552
        // Predicated region
        $region86: #{tpu_custom_call.1} parent=72 // pred_check
          %p1554 = pneg %p136
        $region87: #{tpu_custom_call.1} parent=72 // pred_check_branch
          %1556 = sbr.rel (%p1554) target = $region89
        $region88: #{tpu_custom_call.1} parent=72 // pred_region
          _
        $region89: #{tpu_custom_call.1} parent=72 // pred_fallthru
          _
        // Predicated region
        $region90: #{tpu_custom_call.1} parent=72 // pred_check
          %p1557 = pneg %p136
        $region91: #{tpu_custom_call.1} parent=72 // pred_check_branch
          %1559 = sbr.rel (%p1557) target = $region93
        $region92: #{tpu_custom_call.1} parent=72 // pred_region
          %p1560 = scmp.lt.s32.totalorder %s19, 0
          %s1561 = scalar_select %p1560, %s19, 0
          %s1562 = smul.addr %s1561, 8
          %s1563 = scalar_lea.vmem %s4, %s1562
        $region93: #{tpu_custom_call.1} parent=72 // pred_fallthru
          _
      $region73: #{tpu_custom_call.1} parent=5 // pred_fallthru
        _
      %p1564 = scmp.le.s32.totalorder 2, %s10
      // Predicated region
      $region94: #{tpu_custom_call.1} parent=5 // pred_check
        %p1565 = pneg %p1564
      $region95: #{tpu_custom_call.1} parent=5 // pred_check_branch
        %1567 = sbr.rel (%p1565) target = $region97
      $region96: #{tpu_custom_call.1} parent=5 // pred_region
        %s1568 = ssub.s32 %s10, 2
      $region97: #{tpu_custom_call.1} parent=5 // pred_fallthru
        _
    $region6: #{tpu_custom_call.1} parent=1 // loop_footer
      %s14 = sadd.s32 1, %s10
    $region7: #{tpu_custom_call.1} parent=1 // loop_footer_branch
      %9 = sbr.rel target = $region3
    $region8: #{tpu_custom_call.1} parent=1 // loop_exit
      _

</llo_original>
